<compile_context>
chip_gen: v5e
topology: v5e:2x2
jax: 0.10.0
libtpu: 0.0.40
codegen_flags: <defaults>
</compile_context>

<pallas_src>
import functools
import numpy as np

import jax
import jax.numpy as jnp
from jax.experimental import pallas as pl
from jax.experimental.pallas import tpu as pltpu


# ---------------------------------------------------------------------------
# Fused kernel
# ---------------------------------------------------------------------------

def _fused_generator_kernel(z_ref, *refs, num_conv_layers):
    """Whole-generator forward for one batch element.

    z_ref : (1, z_dim)
    refs  : lin_w (Zd, F0), lin_b (1, F0),
            [M_i (Fin_i, Fout_i), bias_i (1, Fout_i)] * num_conv_layers,
            out_ref (1, F_last)
    """
    out_ref = refs[-1]
    lin_w_ref, lin_b_ref = refs[0], refs[1]

    # Input Linear + ReLU.  The f32 result is already in torch's
    # .view(-1, C0, L0) channel-major flat order, so it feeds M_0 directly.
    x = jnp.dot(z_ref[...], lin_w_ref[...], preferred_element_type=jnp.float32)
    x = jnp.maximum(x + lin_b_ref[...].astype(jnp.float32), 0.0)

    for i in range(num_conv_layers):
        m_ref = refs[2 + 2 * i]
        b_ref = refs[3 + 2 * i]
        acc = jnp.dot(x.astype(m_ref.dtype), m_ref[...],
                      preferred_element_type=jnp.float32)
        acc = acc + b_ref[...].astype(jnp.float32)
        x = jnp.tanh(acc) if i == num_conv_layers - 1 else jnp.maximum(acc, 0.0)

    out_ref[...] = x.astype(out_ref.dtype)


# ---------------------------------------------------------------------------
# Geometry (mirrors G.build_model) and one-time parameter transforms
# ---------------------------------------------------------------------------

def layer_geometry(*, kernel_size, scale_factor, network_levels,
                   progressive_kernels=True, min_kernel_size=4):
    """Replicates G.build_model()'s per-layer (K, stride, padding, output_padding)."""
    geoms = []
    for layer_num in range(network_levels):
        if progressive_kernels:
            K = kernel_size // scale_factor ** (network_levels - layer_num - 1)
            K = min_kernel_size if K < min_kernel_size else K
            dilation = 1
        else:
            K, dilation = kernel_size, 1
        output_padding = 1 if dilation > 1 or scale_factor == 1 else 0
        padding = ((K - 1) * dilation + output_padding - 1) // 2 - (scale_factor - 1) // 2
        if K % 2 != 0:
            padding += 1
            output_padding = 1
        geoms.append(dict(kernel_size=K, stride=scale_factor,
                          padding=padding, output_padding=output_padding))
    return geoms


def _convt_as_matrix(w, *, stride, padding, output_padding, l_in):
    """Dense matrix M such that x_flat @ M == ConvTranspose1d(x) (dilation=1, no bias).

    x_flat[b, ci*l_in + i] = x[b, ci, i];  M[ci*l_in+i, co*l_out+t] = W[ci, co, t+p-i*s].
    """
    w = np.asarray(w, np.float32)                       # (C_in, C_out, K) torch layout
    c_in, c_out, K = w.shape
    l_out = (l_in - 1) * stride - 2 * padding + K + output_padding
    m = np.zeros((c_in, l_in, c_out, l_out), np.float32)
    for i in range(l_in):
        for k in range(K):
            t = i * stride - padding + k
            if 0 <= t < l_out:
                m[:, i, :, t] += w[:, :, k]
    return m.reshape(c_in * l_in, c_out * l_out), l_out


def prepare_params(params, *, channel_list, lower_resolution, geoms,
                   dtype=jnp.float32):
    """One-time (load-time) weight transform: torch layouts -> fused-kernel operands.

    On v6e/v7x, dtype=jnp.bfloat16 halves weight DMA bytes (accumulation stays f32);
    keep float32 on v5e.
    """
    lin_w = jnp.asarray(np.asarray(params["lin_w"], np.float32).T, dtype)   # (Zd, F0)
    lin_b = jnp.asarray(np.asarray(params["lin_b"], np.float32).reshape(1, -1), dtype)
    mats, biases = [], []
    l_cur = lower_resolution
    for i, g in enumerate(geoms):
        m, l_out = _convt_as_matrix(params["conv_w"][i], stride=g["stride"],
                                    padding=g["padding"],
                                    output_padding=g["output_padding"], l_in=l_cur)
        mats.append(jnp.asarray(m, dtype))
        b = np.repeat(np.asarray(params["conv_b"][i], np.float32), l_out)
        biases.append(jnp.asarray(b.reshape(1, -1), dtype))
        l_cur = l_out
    return dict(lin_w=lin_w, lin_b=lin_b, mats=mats, biases=biases,
                out_channels=channel_list[-1], out_len=l_cur)


# ---------------------------------------------------------------------------
# Fused forward wrapper
# ---------------------------------------------------------------------------

def generator_forward(z, prep):
    """Fused Pallas forward of G: Linear+ReLU -> [ConvT1d + ReLU/Tanh] stack."""
    B = z.shape[0]
    z2 = z.reshape(B, 1, -1)                     # batch axis blocked+squeezed by grid
    z_dim = z2.shape[-1]
    f_last = prep["mats"][-1].shape[1]
    n_conv = len(prep["mats"])

    operands = [z2, prep["lin_w"], prep["lin_b"]]
    in_specs = [
        pl.BlockSpec((pl.Squeezed(), 1, z_dim), lambda b: (b, 0, 0)),
        pl.BlockSpec(prep["lin_w"].shape, lambda b: (0, 0)),
        pl.BlockSpec(prep["lin_b"].shape, lambda b: (0, 0)),
    ]
    flops = 2 * B * z_dim * prep["lin_w"].shape[1]
    for m, bias in zip(prep["mats"], prep["biases"]):
        operands += [m, bias]
        in_specs += [pl.BlockSpec(m.shape, lambda b: (0, 0)),
                     pl.BlockSpec(bias.shape, lambda b: (0, 0))]
        flops += 2 * B * m.shape[0] * m.shape[1]   # dense MXU work (incl. band zeros)
    bytes_accessed = sum(int(a.size) * a.dtype.itemsize for a in operands)
    bytes_accessed += int(B * f_last) * z.dtype.itemsize

    kernel = functools.partial(_fused_generator_kernel, num_conv_layers=n_conv)
    out_flat = pl.pallas_call(
        kernel,
        out_shape=jax.ShapeDtypeStruct((B, 1, f_last), z.dtype),
        grid=(B,),
        in_specs=in_specs,
        out_specs=pl.BlockSpec((pl.Squeezed(), 1, f_last), lambda b: (b, 0, 0)),
        compiler_params=pltpu.CompilerParams(
            dimension_semantics=("parallel",),        # both TCs on v7x when B >= 2
            vmem_limit_bytes=32 * 1024 * 1024),
        cost_estimate=pl.CostEstimate(flops=int(flops),
                                      transcendentals=int(B * f_last),
                                      bytes_accessed=int(bytes_accessed)),
    )(*operands)
    # Flat index is co*L_out + t, so this reshape is exactly torch's (B, C_last, L_out).
    return out_flat.reshape(B, prep["out_channels"], prep["out_len"])


# ---------------------------------------------------------------------------
# Pure numpy reference (direct port of the PyTorch forward)
# ---------------------------------------------------------------------------

def _ref_conv_transpose1d(x, w, b, stride, padding, output_padding):
    B, C_in, L_in = x.shape
    C_out, K = w.shape[1], w.shape[2]
    L_out = (L_in - 1) * stride - 2 * padding + K + output_padding
    out = np.zeros((B, C_out, L_out), dtype=np.float64)
    for i in range(L_in):
        for k in range(K):
            t = i * stride - padding + k
            if 0 <= t < L_out:
                out[:, :, t] += x[:, :, i] @ w[:, :, k]   # (B,C_in) @ (C_in,C_out)
    return out + b[None, :, None]


def _ref_forward(z, params, *, channel_list, lower_resolution, geoms):
    z = np.asarray(z, np.float64)
    w = np.asarray(params["lin_w"], np.float64)
    b = np.asarray(params["lin_b"], np.float64)
    h = np.maximum(z @ w.T + b, 0.0)
    x = h.reshape(z.shape[0], channel_list[0], lower_resolution)
    n = len(geoms)
    for i, g in enumerate(geoms):
        x = _ref_conv_transpose1d(x,
                                  np.asarray(params["conv_w"][i], np.float64),
                                  np.asarray(params["conv_b"][i], np.float64),
                                  g["stride"], g["padding"], g["output_padding"])
        x = np.tanh(x) if i == n - 1 else np.maximum(x, 0.0)
    return x


# ---------------------------------------------------------------------------
# Test
# ---------------------------------------------------------------------------

if __name__ == "__main__":
    # Small config consistent with the module: z -> (B, 32, 16) -> 32 -> 64 -> 128 samples.
    B = 2
    z_dim = 8
    lower_resolution = 16
    channel_list = [32, 16, 8, 1]
    network_levels = len(channel_list) - 1
    kernel_size = 16
    scale_factor = 2

    geoms = layer_geometry(kernel_size=kernel_size, scale_factor=scale_factor,
                           network_levels=network_levels, progressive_kernels=True)

    key = jax.random.PRNGKey(0)
    key, kz, klw, klb = jax.random.split(key, 4)
    z = jax.random.normal(kz, (B, z_dim), dtype=jnp.float32)

    lin_out = lower_resolution * channel_list[0]
    params = {
        "lin_w": jax.random.normal(klw, (lin_out, z_dim), jnp.float32) / np.sqrt(z_dim),
        "lin_b": jax.random.normal(klb, (lin_out,), jnp.float32) * 0.1,
        "conv_w": [],
        "conv_b": [],
    }
    for i, g in enumerate(geoms):
        c_in, c_out, K = channel_list[i], channel_list[i + 1], g["kernel_size"]
        key, kw, kb = jax.random.split(key, 3)
        params["conv_w"].append(
            jax.random.normal(kw, (c_in, c_out, K), jnp.float32) / np.sqrt(c_in * K))
        params["conv_b"].append(jax.random.normal(kb, (c_out,), jnp.float32) * 0.1)

    # One-time parameter transform (amortized at load time), then fused forward.
    prep = prepare_params(params, channel_list=channel_list,
                          lower_resolution=lower_resolution, geoms=geoms,
                          dtype=jnp.float32)
    out = generator_forward(z, prep)
    out = jax.block_until_ready(out)

    ref = _ref_forward(np.asarray(z), params, channel_list=channel_list,
                       lower_resolution=lower_resolution, geoms=geoms)
    assert out.shape == (B, channel_list[-1],
                         lower_resolution * scale_factor ** network_levels)
    np.testing.assert_allclose(np.asarray(out), ref, rtol=5e-4, atol=5e-4)

    print("KERNEL_OK")
</pallas_src>

<mosaic_0001>
module attributes {stable_mosaic.version = 11 : i64} {
  func.func @_fused_generator_kernel(%arg0: i32, %arg1: memref<1x1x8xf32, #tpu.memory_space<vmem>>, %arg2: memref<8x512xf32, #tpu.memory_space<vmem>>, %arg3: memref<1x512xf32, #tpu.memory_space<vmem>>, %arg4: memref<512x512xf32, #tpu.memory_space<vmem>>, %arg5: memref<1x512xf32, #tpu.memory_space<vmem>>, %arg6: memref<512x512xf32, #tpu.memory_space<vmem>>, %arg7: memref<1x512xf32, #tpu.memory_space<vmem>>, %arg8: memref<512x128xf32, #tpu.memory_space<vmem>>, %arg9: memref<1x128xf32, #tpu.memory_space<vmem>>, %arg10: memref<1x1x128xf32, #tpu.memory_space<vmem>>) attributes {dimension_semantics = [#tpu.dimension_semantics<parallel>], iteration_bounds = array<i64: 2>, scalar_prefetch = 0 : i64, scratch_operands = 0 : i64, tpu.core_type = #tpu.core_type<tc>, window_params = [{transform_indices = @transform_0, window_bounds = array<i64: 1, 1, 8>}, {pipeline_mode = #tpu.pipeline_mode<synchronous>, transform_indices = @transform_1, window_bounds = array<i64: 8, 512>}, {pipeline_mode = #tpu.pipeline_mode<synchronous>, transform_indices = @transform_2, window_bounds = array<i64: 1, 512>}, {pipeline_mode = #tpu.pipeline_mode<synchronous>, transform_indices = @transform_3, window_bounds = array<i64: 512, 512>}, {pipeline_mode = #tpu.pipeline_mode<synchronous>, transform_indices = @transform_4, window_bounds = array<i64: 1, 512>}, {pipeline_mode = #tpu.pipeline_mode<synchronous>, transform_indices = @transform_5, window_bounds = array<i64: 512, 512>}, {pipeline_mode = #tpu.pipeline_mode<synchronous>, transform_indices = @transform_6, window_bounds = array<i64: 1, 512>}, {pipeline_mode = #tpu.pipeline_mode<synchronous>, transform_indices = @transform_7, window_bounds = array<i64: 512, 128>}, {pipeline_mode = #tpu.pipeline_mode<synchronous>, transform_indices = @transform_8, window_bounds = array<i64: 1, 128>}, {transform_indices = @transform_9, window_bounds = array<i64: 1, 1, 128>}]} {
    %c0 = arith.constant 0 : index
    %c0_0 = arith.constant 0 : index
    %c0_1 = arith.constant 0 : index
    %0 = vector.load %arg1[%c0, %c0_0, %c0_1] : memref<1x1x8xf32, #tpu.memory_space<vmem>>, vector<1x1x8xf32>
    %1 = vector.shape_cast %0 : vector<1x1x8xf32> to vector<1x8xf32>
    %c0_2 = arith.constant 0 : index
    %c0_3 = arith.constant 0 : index
    %2 = vector.load %arg2[%c0_2, %c0_3] : memref<8x512xf32, #tpu.memory_space<vmem>>, vector<8x512xf32>
    %cst = arith.constant dense<0.000000e+00> : vector<1x512xf32>
    %3 = tpu.matmul %1, %2, %cst {dimension_numbers = #tpu.dot_dimension_numbers<[1], [0], [0], [1], [0, 0, 1, 1], [], []>} : vector<1x8xf32>, vector<8x512xf32>, vector<1x512xf32> -> vector<1x512xf32>
    %c0_4 = arith.constant 0 : index
    %c0_5 = arith.constant 0 : index
    %4 = vector.load %arg3[%c0_4, %c0_5] : memref<1x512xf32, #tpu.memory_space<vmem>>, vector<1x512xf32>
    %5 = arith.addf %3, %4 : vector<1x512xf32>
    %cst_6 = arith.constant 0.000000e+00 : f32
    %6 = vector.broadcast %cst_6 : f32 to vector<1x512xf32>
    %7 = arith.maximumf %5, %6 : vector<1x512xf32>
    %c0_7 = arith.constant 0 : index
    %c0_8 = arith.constant 0 : index
    %8 = vector.load %arg4[%c0_7, %c0_8] : memref<512x512xf32, #tpu.memory_space<vmem>>, vector<512x512xf32>
    %cst_9 = arith.constant dense<0.000000e+00> : vector<1x512xf32>
    %9 = tpu.matmul %7, %8, %cst_9 {dimension_numbers = #tpu.dot_dimension_numbers<[1], [0], [0], [1], [0, 0, 1, 1], [], []>} : vector<1x512xf32>, vector<512x512xf32>, vector<1x512xf32> -> vector<1x512xf32>
    %c0_10 = arith.constant 0 : index
    %c0_11 = arith.constant 0 : index
    %10 = vector.load %arg5[%c0_10, %c0_11] : memref<1x512xf32, #tpu.memory_space<vmem>>, vector<1x512xf32>
    %11 = arith.addf %9, %10 : vector<1x512xf32>
    %cst_12 = arith.constant 0.000000e+00 : f32
    %12 = vector.broadcast %cst_12 : f32 to vector<1x512xf32>
    %13 = arith.maximumf %11, %12 : vector<1x512xf32>
    %c0_13 = arith.constant 0 : index
    %c0_14 = arith.constant 0 : index
    %14 = vector.load %arg6[%c0_13, %c0_14] : memref<512x512xf32, #tpu.memory_space<vmem>>, vector<512x512xf32>
    %cst_15 = arith.constant dense<0.000000e+00> : vector<1x512xf32>
    %15 = tpu.matmul %13, %14, %cst_15 {dimension_numbers = #tpu.dot_dimension_numbers<[1], [0], [0], [1], [0, 0, 1, 1], [], []>} : vector<1x512xf32>, vector<512x512xf32>, vector<1x512xf32> -> vector<1x512xf32>
    %c0_16 = arith.constant 0 : index
    %c0_17 = arith.constant 0 : index
    %16 = vector.load %arg7[%c0_16, %c0_17] : memref<1x512xf32, #tpu.memory_space<vmem>>, vector<1x512xf32>
    %17 = arith.addf %15, %16 : vector<1x512xf32>
    %cst_18 = arith.constant 0.000000e+00 : f32
    %18 = vector.broadcast %cst_18 : f32 to vector<1x512xf32>
    %19 = arith.maximumf %17, %18 : vector<1x512xf32>
    %c0_19 = arith.constant 0 : index
    %c0_20 = arith.constant 0 : index
    %20 = vector.load %arg8[%c0_19, %c0_20] : memref<512x128xf32, #tpu.memory_space<vmem>>, vector<512x128xf32>
    %cst_21 = arith.constant dense<0.000000e+00> : vector<1x128xf32>
    %21 = tpu.matmul %19, %20, %cst_21 {dimension_numbers = #tpu.dot_dimension_numbers<[1], [0], [0], [1], [0, 0, 1, 1], [], []>} : vector<1x512xf32>, vector<512x128xf32>, vector<1x128xf32> -> vector<1x128xf32>
    %c0_22 = arith.constant 0 : index
    %c0_23 = arith.constant 0 : index
    %22 = vector.load %arg9[%c0_22, %c0_23] : memref<1x128xf32, #tpu.memory_space<vmem>>, vector<1x128xf32>
    %23 = arith.addf %21, %22 : vector<1x128xf32>
    %24 = math.tanh %23 : vector<1x128xf32>
    %c0_24 = arith.constant 0 : index
    %c0_25 = arith.constant 0 : index
    %c0_26 = arith.constant 0 : index
    %25 = vector.load %arg10[%c0_24, %c0_25, %c0_26] : memref<1x1x128xf32, #tpu.memory_space<vmem>>, vector<1x1x128xf32>
    %26 = vector.shape_cast %25 : vector<1x1x128xf32> to vector<1x128xf32>
    %27 = vector.shape_cast %24 : vector<1x128xf32> to vector<1x1x128xf32>
    tpu.vector_store %arg10[%c0_24, %c0_25, %c0_26], %27 {strides = array<i32>} : memref<1x1x128xf32, #tpu.memory_space<vmem>>, vector<1x1x128xf32>,
    return
  }
  func.func @transform_0(%arg0: i32) -> (i32, i32, i32) {
    %c0_i32 = arith.constant 0 : i32
    %c0_i32_0 = arith.constant 0 : i32
    %c0_i32_1 = arith.constant 0 : i32
    return %arg0, %c0_i32, %c0_i32_0 : i32, i32, i32
  }
  func.func @transform_1(%arg0: i32) -> (i32, i32) {
    %c0_i32 = arith.constant 0 : i32
    %c0_i32_0 = arith.constant 0 : i32
    %c0_i32_1 = arith.constant 0 : i32
    return %c0_i32, %c0_i32_0 : i32, i32
  }
  func.func @transform_2(%arg0: i32) -> (i32, i32) {
    %c0_i32 = arith.constant 0 : i32
    %c0_i32_0 = arith.constant 0 : i32
    %c0_i32_1 = arith.constant 0 : i32
    return %c0_i32, %c0_i32_0 : i32, i32
  }
  func.func @transform_3(%arg0: i32) -> (i32, i32) {
    %c0_i32 = arith.constant 0 : i32
    %c0_i32_0 = arith.constant 0 : i32
    %c0_i32_1 = arith.constant 0 : i32
    return %c0_i32, %c0_i32_0 : i32, i32
  }
  func.func @transform_4(%arg0: i32) -> (i32, i32) {
    %c0_i32 = arith.constant 0 : i32
    %c0_i32_0 = arith.constant 0 : i32
    %c0_i32_1 = arith.constant 0 : i32
    return %c0_i32, %c0_i32_0 : i32, i32
  }
  func.func @transform_5(%arg0: i32) -> (i32, i32) {
    %c0_i32 = arith.constant 0 : i32
    %c0_i32_0 = arith.constant 0 : i32
    %c0_i32_1 = arith.constant 0 : i32
    return %c0_i32, %c0_i32_0 : i32, i32
  }
  func.func @transform_6(%arg0: i32) -> (i32, i32) {
    %c0_i32 = arith.constant 0 : i32
    %c0_i32_0 = arith.constant 0 : i32
    %c0_i32_1 = arith.constant 0 : i32
    return %c0_i32, %c0_i32_0 : i32, i32
  }
  func.func @transform_7(%arg0: i32) -> (i32, i32) {
    %c0_i32 = arith.constant 0 : i32
    %c0_i32_0 = arith.constant 0 : i32
    %c0_i32_1 = arith.constant 0 : i32
    return %c0_i32, %c0_i32_0 : i32, i32
  }
  func.func @transform_8(%arg0: i32) -> (i32, i32) {
    %c0_i32 = arith.constant 0 : i32
    %c0_i32_0 = arith.constant 0 : i32
    %c0_i32_1 = arith.constant 0 : i32
    return %c0_i32, %c0_i32_0 : i32, i32
  }
  func.func @transform_9(%arg0: i32) -> (i32, i32, i32) {
    %c0_i32 = arith.constant 0 : i32
    %c0_i32_0 = arith.constant 0 : i32
    %c0_i32_1 = arith.constant 0 : i32
    return %arg0, %c0_i32, %c0_i32_0 : i32, i32, i32
  }
}

</mosaic_0001>

<llo_original>
// kernel: tpu_custom_call.1
$region0: #{tpu_custom_call.1}
  #allocation0 [shape = 'u32[]', space=smem, size = 0x4, offset = 0x4, fixed_abs, tag = 'smem constant byte address 0x4 - core index']
  #allocation1 [shape = 'u32[72,128]{1,0:T(1,128)}', space=vmem, size = 0x9000, scoped, tag = 'internal scratch']
  %s0 = inlined_call_operand.hbm [shape: f32[2,1,8], index: 0, kind: input, shape index: {}]
  %s1 = inlined_call_operand.hbm [shape: f32[8,512], index: 1, kind: input, shape index: {}]
  %s2 = inlined_call_operand.hbm [shape: f32[1,512], index: 2, kind: input, shape index: {}]
  %s3 = inlined_call_operand.hbm [shape: f32[512,512], index: 3, kind: input, shape index: {}]
  %s4 = inlined_call_operand.hbm [shape: f32[1,512], index: 4, kind: input, shape index: {}]
  %s5 = inlined_call_operand.hbm [shape: f32[512,512], index: 5, kind: input, shape index: {}]
  %s6 = inlined_call_operand.vmem [shape: f32[1,512], index: 6, kind: input, shape index: {}]
  %s7 = inlined_call_operand.hbm [shape: f32[512,128], index: 7, kind: input, shape index: {}]
  %s8 = inlined_call_operand.vmem [shape: f32[1,128], index: 8, kind: input, shape index: {}]
  %s9 = inlined_call_operand.hbm [shape: f32[2,1,128], index: 9, kind: output, shape index: {}]
  %s10 = sld [smem:[#allocation0]]
  $region97: #{tpu_custom_call.1} parent=0
    _
  %s12 = ssub.s32 1, %s10
  %s13 = scalar_select 0, %s12, %s10
  $region1: #{tpu_custom_call.1} parent=0
    #allocation2 [shape = 'u8[1024]{0}', space=vmem, size = 0x400, scoped, tag = 'input window, operand 0']
    #allocation3 [shape = 's32[2]{0}', space=sflag, size = 0x8, scoped, tag = 'scoped memory for tpu_custom_call.1']
    #allocation4 [shape = 's32[2]{0}', space=sflag, size = 0x8, scoped, tag = 'scoped memory for tpu_custom_call.1']
    #allocation5 [shape = 'u8[16384]{0}', space=vmem, size = 0x4000, scoped, tag = 'input window, operand 1, single buffered']
    #allocation6 [shape = 's32[1]{0}', space=sflag, size = 0x4, scoped, tag = 'scoped memory for tpu_custom_call.1']
    #allocation7 [shape = 'u8[2048]{0}', space=vmem, size = 0x800, scoped, tag = 'input window, operand 2, single buffered']
    #allocation8 [shape = 'u8[1048576]{0}', space=vmem, size = 0x100000, scoped, tag = 'input window, operand 3, single buffered']
    #allocation9 [shape = 's32[1]{0}', space=sflag, size = 0x4, scoped, tag = 'scoped memory for tpu_custom_call.1']
    #allocation10 [shape = 'u8[2048]{0}', space=vmem, size = 0x800, scoped, tag = 'input window, operand 4, single buffered']
    #allocation11 [shape = 'u8[1048576]{0}', space=vmem, size = 0x100000, scoped, tag = 'input window, operand 5, single buffered']
    #allocation12 [shape = 's32[1]{0}', space=sflag, size = 0x4, scoped, tag = 'scoped memory for tpu_custom_call.1']
    #allocation13 [shape = 'u8[262144]{0}', space=vmem, size = 0x40000, scoped, tag = 'input window, operand 7, single buffered']
    #allocation14 [shape = 'u8[1024]{0}', space=vmem, size = 0x400, scoped, tag = 'output window, operand 0']
    %14 = vsyncpa [#allocation3], 0
    %s15 = scalar_lea.sflag [#allocation3], 1
    %16 = vsyncpa %s15, 0
    %17 = vsyncpa [#allocation6], 0
    %18 = vsyncpa [#allocation9], 0
    %19 = vsyncpa [#allocation12], 0
    %20 = vsyncpa [#allocation4], 0
    %s21 = scalar_lea.sflag [#allocation4], 1
    %22 = vsyncpa %s21, 0
    loop: start=0, step=1, limit=4
    $region2: #{tpu_custom_call.1} parent=1 // loop_pre_header
      _
    $region3: #{tpu_custom_call.1} parent=1 // loop_header
      %s24 = sphi 0, %s28
      %p25 = scmp.ge.s32.totalorder %s24, 4
      %s34 = sphi 0, %s36
      %s37 = sphi 0, %s34
      %s38 = sphi 0, %s37
      %s54 = sphi 0, %s38
      %s58 = sphi 0, %s58
      %s60 = sphi 0, %s58
      %s61 = sphi 0, %s60
      %s75 = sphi 0, %s61
      %s79 = sphi 0, %s79
      %s81 = sphi 0, %s79
      %s82 = sphi 0, %s81
      %s96 = sphi 0, %s82
      %s100 = sphi 0, %s100
      %s102 = sphi 0, %s100
      %s103 = sphi 0, %s102
      %s117 = sphi 0, %s103
      %s121 = sphi 0, %s121
      %s123 = sphi 0, %s121
      %s124 = sphi 0, %s123
      %s138 = sphi 0, %s124
      %s142 = sphi 0, %s142
      %s144 = sphi 0, %s142
      %s145 = sphi 0, %s144
      %s159 = sphi 0, %s145
      %s163 = sphi 0, %s163
      %s165 = sphi 0, %s163
      %s166 = sphi 0, %s165
      %s180 = sphi 0, %s166
      %s184 = sphi 0, %s184
      %s186 = sphi 0, %s184
      %s187 = sphi 0, %s186
      %s201 = sphi 0, %s187
      %s205 = sphi 0, %s205
      %s207 = sphi 0, %s205
      %s208 = sphi 0, %s207
      %s222 = sphi 0, %s208
      %s228 = sphi 0, %s230
      %s231 = sphi 0, %s228
      %s232 = sphi 0, %s231
      %s248 = sphi 0, %s232
    $region4: #{tpu_custom_call.1} parent=1 // loop_header_branch
      %27 = sbr.rel (%p25) target = $region8
    $region5: #{tpu_custom_call.1} parent=1 // loop_body
      %s29 = ssub.s32 %s24, 1
      %s30 = ssub.s32 %s24, 2
      %s31 = sadd.s32 %s24, 1
      %s32 = ssub.s32 %s24, %s31
      %p33 = scmp.eq.s32.totalorder %s32, 0
      %s35 = sadd.s32 %s34, 1
      %s36 = scalar_select %p33, %s34, %s35
      %p39 = pneg %p33
      %p40 = scmp.eq.s32.totalorder %s24, 1
      %p41 = por %p39, %p40
      %p42 = scmp.ne.s32.totalorder %s34, %s37
      %p43 = scmp.eq.s32.totalorder %s24, 0
      %p44 = por %p42, %p43
      %p45 = scmp.ne.s32.totalorder %s34, %s37
      %p46 = scmp.eq.s32.totalorder %s29, 1
      %p47 = por %p45, %p46
      %p48 = scmp.ne.s32.totalorder %s37, %s38
      %p49 = scmp.eq.s32.totalorder %s29, 0
      %p50 = por %p48, %p49
      %p51 = scmp.ne.s32.totalorder %s37, %s38
      %p52 = scmp.eq.s32.totalorder %s30, 1
      %p53 = por %p51, %p52
      %p55 = scmp.ne.s32.totalorder %s38, %s54
      %p56 = scmp.eq.s32.totalorder %s30, 0
      %p57 = por %p55, %p56
      %s59 = sadd.s32 %s58, 1
      %p62 = scmp.eq.s32.totalorder %s24, 1
      %p63 = scmp.ne.s32.totalorder %s58, %s60
      %p64 = scmp.eq.s32.totalorder %s24, 0
      %p65 = por %p63, %p64
      %p66 = scmp.ne.s32.totalorder %s58, %s60
      %p67 = scmp.eq.s32.totalorder %s29, 1
      %p68 = por %p66, %p67
      %p69 = scmp.ne.s32.totalorder %s60, %s61
      %p70 = scmp.eq.s32.totalorder %s29, 0
      %p71 = por %p69, %p70
      %p72 = scmp.ne.s32.totalorder %s60, %s61
      %p73 = scmp.eq.s32.totalorder %s30, 1
      %p74 = por %p72, %p73
      %p76 = scmp.ne.s32.totalorder %s61, %s75
      %p77 = scmp.eq.s32.totalorder %s30, 0
      %p78 = por %p76, %p77
      %s80 = sadd.s32 %s79, 1
      %p83 = scmp.eq.s32.totalorder %s24, 1
      %p84 = scmp.ne.s32.totalorder %s79, %s81
      %p85 = scmp.eq.s32.totalorder %s24, 0
      %p86 = por %p84, %p85
      %p87 = scmp.ne.s32.totalorder %s79, %s81
      %p88 = scmp.eq.s32.totalorder %s29, 1
      %p89 = por %p87, %p88
      %p90 = scmp.ne.s32.totalorder %s81, %s82
      %p91 = scmp.eq.s32.totalorder %s29, 0
      %p92 = por %p90, %p91
      %p93 = scmp.ne.s32.totalorder %s81, %s82
      %p94 = scmp.eq.s32.totalorder %s30, 1
      %p95 = por %p93, %p94
      %p97 = scmp.ne.s32.totalorder %s82, %s96
      %p98 = scmp.eq.s32.totalorder %s30, 0
      %p99 = por %p97, %p98
      %s101 = sadd.s32 %s100, 1
      %p104 = scmp.eq.s32.totalorder %s24, 1
      %p105 = scmp.ne.s32.totalorder %s100, %s102
      %p106 = scmp.eq.s32.totalorder %s24, 0
      %p107 = por %p105, %p106
      %p108 = scmp.ne.s32.totalorder %s100, %s102
      %p109 = scmp.eq.s32.totalorder %s29, 1
      %p110 = por %p108, %p109
      %p111 = scmp.ne.s32.totalorder %s102, %s103
      %p112 = scmp.eq.s32.totalorder %s29, 0
      %p113 = por %p111, %p112
      %p114 = scmp.ne.s32.totalorder %s102, %s103
      %p115 = scmp.eq.s32.totalorder %s30, 1
      %p116 = por %p114, %p115
      %p118 = scmp.ne.s32.totalorder %s103, %s117
      %p119 = scmp.eq.s32.totalorder %s30, 0
      %p120 = por %p118, %p119
      %s122 = sadd.s32 %s121, 1
      %p125 = scmp.eq.s32.totalorder %s24, 1
      %p126 = scmp.ne.s32.totalorder %s121, %s123
      %p127 = scmp.eq.s32.totalorder %s24, 0
      %p128 = por %p126, %p127
      %p129 = scmp.ne.s32.totalorder %s121, %s123
      %p130 = scmp.eq.s32.totalorder %s29, 1
      %p131 = por %p129, %p130
      %p132 = scmp.ne.s32.totalorder %s123, %s124
      %p133 = scmp.eq.s32.totalorder %s29, 0
      %p134 = por %p132, %p133
      %p135 = scmp.ne.s32.totalorder %s123, %s124
      %p136 = scmp.eq.s32.totalorder %s30, 1
      %p137 = por %p135, %p136
      %p139 = scmp.ne.s32.totalorder %s124, %s138
      %p140 = scmp.eq.s32.totalorder %s30, 0
      %p141 = por %p139, %p140
      %s143 = sadd.s32 %s142, 1
      %p146 = scmp.eq.s32.totalorder %s24, 1
      %p147 = scmp.ne.s32.totalorder %s142, %s144
      %p148 = scmp.eq.s32.totalorder %s24, 0
      %p149 = por %p147, %p148
      %p150 = scmp.ne.s32.totalorder %s142, %s144
      %p151 = scmp.eq.s32.totalorder %s29, 1
      %p152 = por %p150, %p151
      %p153 = scmp.ne.s32.totalorder %s144, %s145
      %p154 = scmp.eq.s32.totalorder %s29, 0
      %p155 = por %p153, %p154
      %p156 = scmp.ne.s32.totalorder %s144, %s145
      %p157 = scmp.eq.s32.totalorder %s30, 1
      %p158 = por %p156, %p157
      %p160 = scmp.ne.s32.totalorder %s145, %s159
      %p161 = scmp.eq.s32.totalorder %s30, 0
      %p162 = por %p160, %p161
      %s164 = sadd.s32 %s163, 1
      %p167 = scmp.eq.s32.totalorder %s24, 1
      %p168 = scmp.ne.s32.totalorder %s163, %s165
      %p169 = scmp.eq.s32.totalorder %s24, 0
      %p170 = por %p168, %p169
      %p171 = scmp.ne.s32.totalorder %s163, %s165
      %p172 = scmp.eq.s32.totalorder %s29, 1
      %p173 = por %p171, %p172
      %p174 = scmp.ne.s32.totalorder %s165, %s166
      %p175 = scmp.eq.s32.totalorder %s29, 0
      %p176 = por %p174, %p175
      %p177 = scmp.ne.s32.totalorder %s165, %s166
      %p178 = scmp.eq.s32.totalorder %s30, 1
      %p179 = por %p177, %p178
      %p181 = scmp.ne.s32.totalorder %s166, %s180
      %p182 = scmp.eq.s32.totalorder %s30, 0
      %p183 = por %p181, %p182
      %s185 = sadd.s32 %s184, 1
      %p188 = scmp.eq.s32.totalorder %s24, 1
      %p189 = scmp.ne.s32.totalorder %s184, %s186
      %p190 = scmp.eq.s32.totalorder %s24, 0
      %p191 = por %p189, %p190
      %p192 = scmp.ne.s32.totalorder %s184, %s186
      %p193 = scmp.eq.s32.totalorder %s29, 1
      %p194 = por %p192, %p193
      %p195 = scmp.ne.s32.totalorder %s186, %s187
      %p196 = scmp.eq.s32.totalorder %s29, 0
      %p197 = por %p195, %p196
      %p198 = scmp.ne.s32.totalorder %s186, %s187
      %p199 = scmp.eq.s32.totalorder %s30, 1
      %p200 = por %p198, %p199
      %p202 = scmp.ne.s32.totalorder %s187, %s201
      %p203 = scmp.eq.s32.totalorder %s30, 0
      %p204 = por %p202, %p203
      %s206 = sadd.s32 %s205, 1
      %p209 = scmp.eq.s32.totalorder %s24, 1
      %p210 = scmp.ne.s32.totalorder %s205, %s207
      %p211 = scmp.eq.s32.totalorder %s24, 0
      %p212 = por %p210, %p211
      %p213 = scmp.ne.s32.totalorder %s205, %s207
      %p214 = scmp.eq.s32.totalorder %s29, 1
      %p215 = por %p213, %p214
      %p216 = scmp.ne.s32.totalorder %s207, %s208
      %p217 = scmp.eq.s32.totalorder %s29, 0
      %p218 = por %p216, %p217
      %p219 = scmp.ne.s32.totalorder %s207, %s208
      %p220 = scmp.eq.s32.totalorder %s30, 1
      %p221 = por %p219, %p220
      %p223 = scmp.ne.s32.totalorder %s208, %s222
      %p224 = scmp.eq.s32.totalorder %s30, 0
      %p225 = por %p223, %p224
      %s226 = ssub.s32 %s24, %s31
      %p227 = scmp.eq.s32.totalorder %s226, 0
      %s229 = sadd.s32 %s228, 1
      %s230 = scalar_select %p227, %s228, %s229
      %p233 = pneg %p227
      %p234 = scmp.eq.s32.totalorder %s24, 1
      %p235 = por %p233, %p234
      %p236 = scmp.ne.s32.totalorder %s228, %s231
      %p237 = scmp.eq.s32.totalorder %s24, 0
      %p238 = por %p236, %p237
      %p239 = scmp.ne.s32.totalorder %s228, %s231
      %p240 = scmp.eq.s32.totalorder %s29, 1
      %p241 = por %p239, %p240
      %p242 = scmp.ne.s32.totalorder %s231, %s232
      %p243 = scmp.eq.s32.totalorder %s29, 0
      %p244 = por %p242, %p243
      %p245 = scmp.ne.s32.totalorder %s231, %s232
      %p246 = scmp.eq.s32.totalorder %s30, 1
      %p247 = por %p245, %p246
      %p249 = scmp.ne.s32.totalorder %s232, %s248
      %p250 = scmp.eq.s32.totalorder %s30, 0
      %p251 = por %p249, %p250
      %p252 = scmp.le.s32.totalorder 1, %s24
      %p253 = scmp.lt.s32.totalorder %s24, 3
      %p254 = pnand %p252, %p253
      %p255 = pneg %p254
      // Predicated region
      $region9: #{tpu_custom_call.1} parent=5 // pred_check
        _
      $region10: #{tpu_custom_call.1} parent=5 // pred_check_branch
        %257 = sbr.rel (%p254) target = $region12
      $region11: #{tpu_custom_call.1} parent=5 // pred_region
        %s258 = ssub.s32 %s24, 1
        // Predicated region
        $region13: #{tpu_custom_call.1} parent=11 // pred_check
          %p259 = pneg %p71
        $region14: #{tpu_custom_call.1} parent=11 // pred_check_branch
          %261 = sbr.rel (%p259) target = $region16
        $region15: #{tpu_custom_call.1} parent=11 // pred_region
          %263 = vsyncadd [#allocation6], 0
          %s265 = sshll.u32 %s1, 4
          %s266 = int_to_ptr.hbm [resolvable:$true] %s265
          %s267 = sshll.u32 [#allocation5], 4
          %s268 = int_to_ptr.vmem [resolvable:$true] %s267
          %270 = dma.hbm_to_vmem [thread:$0]  %s266, 512, %s268, [#allocation6]
        $region16: #{tpu_custom_call.1} parent=11 // pred_fallthru
          _
        // Predicated region
        $region17: #{tpu_custom_call.1} parent=11 // pred_check
          %p271 = pneg %p92
        $region18: #{tpu_custom_call.1} parent=11 // pred_check_branch
          %273 = sbr.rel (%p271) target = $region20
        $region19: #{tpu_custom_call.1} parent=11 // pred_region
          %275 = vsyncadd [#allocation6], 0
          %s277 = sshll.u32 %s2, 4
          %s278 = int_to_ptr.hbm [resolvable:$true] %s277
          %s279 = sshll.u32 [#allocation7], 4
          %s280 = int_to_ptr.vmem [resolvable:$true] %s279
          %282 = dma.hbm_to_vmem [thread:$0]  %s278, 64, %s280, [#allocation6]
        $region20: #{tpu_custom_call.1} parent=11 // pred_fallthru
          _
        // Predicated region
        $region21: #{tpu_custom_call.1} parent=11 // pred_check
          %p283 = pneg %p113
        $region22: #{tpu_custom_call.1} parent=11 // pred_check_branch
          %285 = sbr.rel (%p283) target = $region24
        $region23: #{tpu_custom_call.1} parent=11 // pred_region
          %287 = vsyncadd [#allocation9], 0
          %s288 = sshll.u32 %s3, 4
          %s289 = int_to_ptr.hbm [resolvable:$true] %s288
          %s290 = sshll.u32 [#allocation8], 4
          %s291 = int_to_ptr.vmem [resolvable:$true] %s290
          %296 = dma.hbm_to_vmem [thread:$0]  %s289, 32768, %s291, [#allocation9], 512, 512, 32
        $region24: #{tpu_custom_call.1} parent=11 // pred_fallthru
          _
        // Predicated region
        $region25: #{tpu_custom_call.1} parent=11 // pred_check
          %p297 = pneg %p134
        $region26: #{tpu_custom_call.1} parent=11 // pred_check_branch
          %299 = sbr.rel (%p297) target = $region28
        $region27: #{tpu_custom_call.1} parent=11 // pred_region
          %301 = vsyncadd [#allocation9], 0
          %s303 = sshll.u32 %s4, 4
          %s304 = int_to_ptr.hbm [resolvable:$true] %s303
          %s305 = sshll.u32 [#allocation10], 4
          %s306 = int_to_ptr.vmem [resolvable:$true] %s305
          %308 = dma.hbm_to_vmem [thread:$0]  %s304, 64, %s306, [#allocation9]
        $region28: #{tpu_custom_call.1} parent=11 // pred_fallthru
          _
        // Predicated region
        $region29: #{tpu_custom_call.1} parent=11 // pred_check
          %p309 = pneg %p155
        $region30: #{tpu_custom_call.1} parent=11 // pred_check_branch
          %311 = sbr.rel (%p309) target = $region32
        $region31: #{tpu_custom_call.1} parent=11 // pred_region
          %313 = vsyncadd [#allocation12], 0
          %s314 = sshll.u32 %s5, 4
          %s315 = int_to_ptr.hbm [resolvable:$true] %s314
          %s316 = sshll.u32 [#allocation11], 4
          %s317 = int_to_ptr.vmem [resolvable:$true] %s316
          %322 = dma.hbm_to_vmem [thread:$0]  %s315, 32768, %s317, [#allocation12], 512, 512, 32
        $region32: #{tpu_custom_call.1} parent=11 // pred_fallthru
          _
        // Predicated region
        $region33: #{tpu_custom_call.1} parent=11 // pred_check
          %p323 = pneg %p176
        $region34: #{tpu_custom_call.1} parent=11 // pred_check_branch
          %325 = sbr.rel (%p323) target = $region36
        $region35: #{tpu_custom_call.1} parent=11 // pred_region
          _
        $region36: #{tpu_custom_call.1} parent=11 // pred_fallthru
          _
        // Predicated region
        $region37: #{tpu_custom_call.1} parent=11 // pred_check
          %p326 = pneg %p197
        $region38: #{tpu_custom_call.1} parent=11 // pred_check_branch
          %328 = sbr.rel (%p326) target = $region40
        $region39: #{tpu_custom_call.1} parent=11 // pred_region
          %330 = vsyncadd [#allocation12], 0
          %s331 = sshll.u32 %s7, 4
          %s332 = int_to_ptr.hbm [resolvable:$true] %s331
          %s333 = sshll.u32 [#allocation13], 4
          %s334 = int_to_ptr.vmem [resolvable:$true] %s333
          %339 = dma.hbm_to_vmem [thread:$0]  %s332, 8192, %s334, [#allocation12], 128, 128, 8
        $region40: #{tpu_custom_call.1} parent=11 // pred_fallthru
          _
        // Predicated region
        $region41: #{tpu_custom_call.1} parent=11 // pred_check
          %p340 = pneg %p218
        $region42: #{tpu_custom_call.1} parent=11 // pred_check_branch
          %342 = sbr.rel (%p340) target = $region44
        $region43: #{tpu_custom_call.1} parent=11 // pred_region
          _
        $region44: #{tpu_custom_call.1} parent=11 // pred_fallthru
          _
      $region12: #{tpu_custom_call.1} parent=5 // pred_fallthru
        _
      %p343 = scmp.lt.s32.totalorder %s24, 2
      // Predicated region
      $region45: #{tpu_custom_call.1} parent=5 // pred_check
        %p344 = pneg %p343
      $region46: #{tpu_custom_call.1} parent=5 // pred_check_branch
        %346 = sbr.rel (%p344) target = $region48
      $region47: #{tpu_custom_call.1} parent=5 // pred_region
        // Predicated region
        $region49: #{tpu_custom_call.1} parent=47 // pred_check
          %p347 = pneg %p44
        $region50: #{tpu_custom_call.1} parent=47 // pred_check_branch
          %349 = sbr.rel (%p347) target = $region52
        $region51: #{tpu_custom_call.1} parent=47 // pred_region
          %s350 = sand.u32 %s34, 1
          %s351 = scalar_lea.sflag [#allocation3], %s350
          %s352 = sand.u32 %s34, 1
          %s353 = scalar_lea.vmem [#allocation2], %s352
          %355 = vsyncadd %s351, 0
          %s356 = scalar_lea.hbm %s0, %s24
          %s358 = sshll.u32 %s356, 4
          %s359 = int_to_ptr.hbm [resolvable:$true] %s358
          %s360 = sshll.u32 %s353, 4
          %s361 = int_to_ptr.vmem [resolvable:$true] %s360
          %363 = dma.hbm_to_vmem [thread:$0]  %s359, 16, %s361, %s351
        $region52: #{tpu_custom_call.1} parent=47 // pred_fallthru
          _
      $region48: #{tpu_custom_call.1} parent=5 // pred_fallthru
        _
      %p364 = scmp.le.s32.totalorder 1, %s24
      %p365 = scmp.lt.s32.totalorder %s24, 3
      %p366 = pnand %p364, %p365
      %p367 = pneg %p366
      // Predicated region
      $region53: #{tpu_custom_call.1} parent=5 // pred_check
        _
      $region54: #{tpu_custom_call.1} parent=5 // pred_check_branch
        %369 = sbr.rel (%p366) target = $region56
      $region55: #{tpu_custom_call.1} parent=5 // pred_region
        %s370 = ssub.s32 %s24, 1
        %s371 = sand.u32 %s37, 1
        %s372 = scalar_lea.sflag [#allocation3], %s371
        %s373 = sand.u32 %s37, 1
        %s374 = scalar_lea.vmem [#allocation2], %s373
        // Predicated region
        $region57: #{tpu_custom_call.1} parent=55 // pred_check
          %p375 = pneg %p50
        $region58: #{tpu_custom_call.1} parent=55 // pred_check_branch
          %377 = sbr.rel (%p375) target = $region60
        $region59: #{tpu_custom_call.1} parent=55 // pred_region
          %379 = dma.done %s372, 16
        $region60: #{tpu_custom_call.1} parent=55 // pred_fallthru
          _
        // Predicated region
        $region61: #{tpu_custom_call.1} parent=55 // pred_check
          %p380 = pneg %p71
        $region62: #{tpu_custom_call.1} parent=55 // pred_check_branch
          %382 = sbr.rel (%p380) target = $region64
        $region63: #{tpu_custom_call.1} parent=55 // pred_region
          %384 = dma.done [#allocation6], 512
        $region64: #{tpu_custom_call.1} parent=55 // pred_fallthru
          _
        // Predicated region
        $region65: #{tpu_custom_call.1} parent=55 // pred_check
          %p385 = pneg %p92
        $region66: #{tpu_custom_call.1} parent=55 // pred_check_branch
          %387 = sbr.rel (%p385) target = $region68
        $region67: #{tpu_custom_call.1} parent=55 // pred_region
          %389 = dma.done [#allocation6], 64
        $region68: #{tpu_custom_call.1} parent=55 // pred_fallthru
          _
        // Predicated region
        $region69: #{tpu_custom_call.1} parent=55 // pred_check
          %p390 = pneg %p113
        $region70: #{tpu_custom_call.1} parent=55 // pred_check_branch
          %392 = sbr.rel (%p390) target = $region72
        $region71: #{tpu_custom_call.1} parent=55 // pred_region
          %394 = dma.done [#allocation9], 32768
        $region72: #{tpu_custom_call.1} parent=55 // pred_fallthru
          _
        // Predicated region
        $region73: #{tpu_custom_call.1} parent=55 // pred_check
          %p395 = pneg %p134
        $region74: #{tpu_custom_call.1} parent=55 // pred_check_branch
          %397 = sbr.rel (%p395) target = $region76
        $region75: #{tpu_custom_call.1} parent=55 // pred_region
          %399 = dma.done [#allocation9], 64
        $region76: #{tpu_custom_call.1} parent=55 // pred_fallthru
          _
        // Predicated region
        $region77: #{tpu_custom_call.1} parent=55 // pred_check
          %p400 = pneg %p155
        $region78: #{tpu_custom_call.1} parent=55 // pred_check_branch
          %402 = sbr.rel (%p400) target = $region80
        $region79: #{tpu_custom_call.1} parent=55 // pred_region
          %404 = dma.done [#allocation12], 32768
        $region80: #{tpu_custom_call.1} parent=55 // pred_fallthru
          _
        // Predicated region
        $region81: #{tpu_custom_call.1} parent=55 // pred_check
          %p405 = pneg %p197
        $region82: #{tpu_custom_call.1} parent=55 // pred_check_branch
          %407 = sbr.rel (%p405) target = $region84
        $region83: #{tpu_custom_call.1} parent=55 // pred_region
          %409 = dma.done [#allocation12], 8192
        $region84: #{tpu_custom_call.1} parent=55 // pred_fallthru
          _
        %s410 = sand.u32 %s37, 1
        %s411 = scalar_lea.sflag [#allocation3], %s410
        %s412 = sand.u32 %s37, 1
        %s413 = scalar_lea.vmem [#allocation2], %s412
        %p414 = pneg %p50
        %p415 = pneg %p47
        %p416 = pneg %p71
        %p417 = pneg %p68
        %p418 = pneg %p92
        %p419 = pneg %p89
        %p420 = pneg %p113
        %p421 = pneg %p110
        %p422 = pneg %p134
        %p423 = pneg %p131
        %p424 = pneg %p155
        %p425 = pneg %p152
        %p426 = pneg %p176
        %p427 = pneg %p173
        %p428 = pneg %p197
        %p429 = pneg %p194
        %p430 = pneg %p218
        %p431 = pneg %p215
        %p432 = pneg %p244
        %p433 = pneg %p241
        %s434 = sand.u32 %s231, 1
        %s435 = scalar_lea.sflag [#allocation4], %s434
        %s436 = sand.u32 %s231, 1
        %s437 = scalar_lea.vmem [#allocation14], %s436
        %v438 = vld [vmem:[%s374] sm:$0x1]
        %v439 = vld [vmem:[#allocation5] sm:$0xff]
        %v440 = vld [vmem:[#allocation5 + $0x8] sm:$0xff]
        %v441 = vld [vmem:[#allocation5 + $0x10] sm:$0xff]
        %v442 = vld [vmem:[#allocation5 + $0x18] sm:$0xff]
        %v443 = vld [vmem:[#allocation7] sm:$0xf]
        %v445 = vperm.slane %v443, 0
        %v446 = vperm.slane %v443, 1
        %v447 = vperm.slane %v443, 2
        %v448 = vperm.slane %v443, 3
        %vm453 = vcmask 64512
        %v455 = vsel %vm453, %v438, 0
        %457 = vmatpush.msra.mxu0 0.0
        %458 = vmatpush.msra.mxu0 0.0
        %459 = vmatpush.msra.mxu0 0.0
        %460 = vmatpush.msra.mxu0 0.0
        %461 = vmatpush.msra.mxu0 0.0
        %462 = vmatpush.msra.mxu0 0.0
        %463 = vmatpush.msra.mxu0 0.0
        %464 = vmatpush.msra.mxu0 0.0
        %465 = vmatpush.msra.mxu0 0.0
        %466 = vmatpush.msra.mxu0 0.0
        %467 = vmatpush.msra.mxu0 0.0
        %468 = vmatpush.msra.mxu0 0.0
        %469 = vmatpush.msra.mxu0 0.0
        %470 = vmatpush.msra.mxu0 0.0
        %471 = vmatpush.msra.mxu0 0.0
        %472 = vmatpush.msra.mxu0 %v439
        %473 = vmatmul.f32.gmra.mxu0 %v455
        %v474 = vpop.f32.mrf.mxu0
        %v475 = vadd.f32 %v445, %v474
        %476 = vdwg.mxu0
        %477 = vmatpush.msra.mxu0 0.0
        %478 = vmatpush.msra.mxu0 0.0
        %479 = vmatpush.msra.mxu0 0.0
        %480 = vmatpush.msra.mxu0 0.0
        %481 = vmatpush.msra.mxu0 0.0
        %482 = vmatpush.msra.mxu0 0.0
        %483 = vmatpush.msra.mxu0 0.0
        %484 = vmatpush.msra.mxu0 0.0
        %485 = vmatpush.msra.mxu0 0.0
        %486 = vmatpush.msra.mxu0 0.0
        %487 = vmatpush.msra.mxu0 0.0
        %488 = vmatpush.msra.mxu0 0.0
        %489 = vmatpush.msra.mxu0 0.0
        %490 = vmatpush.msra.mxu0 0.0
        %491 = vmatpush.msra.mxu0 0.0
        %492 = vmatpush.msra.mxu0 %v440
        %493 = vmatmul.f32.gmra.mxu0 %v455
        %v494 = vpop.f32.mrf.mxu0
        %v495 = vadd.f32 %v446, %v494
        %496 = vdwg.mxu0
        %497 = vmatpush.msra.mxu0 0.0
        %498 = vmatpush.msra.mxu0 0.0
        %499 = vmatpush.msra.mxu0 0.0
        %500 = vmatpush.msra.mxu0 0.0
        %501 = vmatpush.msra.mxu0 0.0
        %502 = vmatpush.msra.mxu0 0.0
        %503 = vmatpush.msra.mxu0 0.0
        %504 = vmatpush.msra.mxu0 0.0
        %505 = vmatpush.msra.mxu0 0.0
        %506 = vmatpush.msra.mxu0 0.0
        %507 = vmatpush.msra.mxu0 0.0
        %508 = vmatpush.msra.mxu0 0.0
        %509 = vmatpush.msra.mxu0 0.0
        %510 = vmatpush.msra.mxu0 0.0
        %511 = vmatpush.msra.mxu0 0.0
        %512 = vmatpush.msra.mxu0 %v441
        %513 = vmatmul.f32.gmra.mxu0 %v455
        %v514 = vpop.f32.mrf.mxu0
        %v515 = vadd.f32 %v447, %v514
        %516 = vdwg.mxu0
        %517 = vmatpush.msra.mxu0 0.0
        %518 = vmatpush.msra.mxu0 0.0
        %519 = vmatpush.msra.mxu0 0.0
        %520 = vmatpush.msra.mxu0 0.0
        %521 = vmatpush.msra.mxu0 0.0
        %522 = vmatpush.msra.mxu0 0.0
        %523 = vmatpush.msra.mxu0 0.0
        %524 = vmatpush.msra.mxu0 0.0
        %525 = vmatpush.msra.mxu0 0.0
        %526 = vmatpush.msra.mxu0 0.0
        %527 = vmatpush.msra.mxu0 0.0
        %528 = vmatpush.msra.mxu0 0.0
        %529 = vmatpush.msra.mxu0 0.0
        %530 = vmatpush.msra.mxu0 0.0
        %531 = vmatpush.msra.mxu0 0.0
        %532 = vmatpush.msra.mxu0 %v442
        %533 = vmatmul.f32.gmra.mxu0 %v455
        %v534 = vpop.f32.mrf.mxu0
        %v535 = vadd.f32 %v448, %v534
        %536 = vdwg.mxu0
        %v537 = vmax.f32 %v475, 0.0
        %v538 = vmax.f32 %v495, 0.0
        %v539 = vmax.f32 %v515, 0.0
        %v540 = vmax.f32 %v535, 0.0
        %v541 = vld [vmem:[#allocation8] sm:$0xff]
        %v542 = vld [vmem:[#allocation8 + $0x8] sm:$0xff]
        %v543 = vld [vmem:[#allocation8 + $0x10] sm:$0xff]
        %v544 = vld [vmem:[#allocation8 + $0x18] sm:$0xff]
        %v545 = vld [vmem:[#allocation8 + $0x20] sm:$0xff]
        %v546 = vld [vmem:[#allocation8 + $0x28] sm:$0xff]
        %v547 = vld [vmem:[#allocation8 + $0x30] sm:$0xff]
        %v548 = vld [vmem:[#allocation8 + $0x38] sm:$0xff]
        %v549 = vld [vmem:[#allocation8 + $0x40] sm:$0xff]
        %v550 = vld [vmem:[#allocation8 + $0x48] sm:$0xff]
        %v551 = vld [vmem:[#allocation8 + $0x50] sm:$0xff]
        %v552 = vld [vmem:[#allocation8 + $0x58] sm:$0xff]
        %v553 = vld [vmem:[#allocation8 + $0x60] sm:$0xff]
        %v554 = vld [vmem:[#allocation8 + $0x68] sm:$0xff]
        %v555 = vld [vmem:[#allocation8 + $0x70] sm:$0xff]
        %v556 = vld [vmem:[#allocation8 + $0x78] sm:$0xff]
        %v557 = vld [vmem:[#allocation8 + $0x80] sm:$0xff]
        %v558 = vld [vmem:[#allocation8 + $0x88] sm:$0xff]
        %v559 = vld [vmem:[#allocation8 + $0x90] sm:$0xff]
        %v560 = vld [vmem:[#allocation8 + $0x98] sm:$0xff]
        %v561 = vld [vmem:[#allocation8 + $0xa0] sm:$0xff]
        %v562 = vld [vmem:[#allocation8 + $0xa8] sm:$0xff]
        %v563 = vld [vmem:[#allocation8 + $0xb0] sm:$0xff]
        %v564 = vld [vmem:[#allocation8 + $0xb8] sm:$0xff]
        %v565 = vld [vmem:[#allocation8 + $0xc0] sm:$0xff]
        %v566 = vld [vmem:[#allocation8 + $0xc8] sm:$0xff]
        %v567 = vld [vmem:[#allocation8 + $0xd0] sm:$0xff]
        %v568 = vld [vmem:[#allocation8 + $0xd8] sm:$0xff]
        %v569 = vld [vmem:[#allocation8 + $0xe0] sm:$0xff]
        %v570 = vld [vmem:[#allocation8 + $0xe8] sm:$0xff]
        %v571 = vld [vmem:[#allocation8 + $0xf0] sm:$0xff]
        %v572 = vld [vmem:[#allocation8 + $0xf8] sm:$0xff]
        %v573 = vld [vmem:[#allocation8 + $0x100] sm:$0xff]
        %v574 = vld [vmem:[#allocation8 + $0x108] sm:$0xff]
        %v575 = vld [vmem:[#allocation8 + $0x110] sm:$0xff]
        %v576 = vld [vmem:[#allocation8 + $0x118] sm:$0xff]
        %v577 = vld [vmem:[#allocation8 + $0x120] sm:$0xff]
        %v578 = vld [vmem:[#allocation8 + $0x128] sm:$0xff]
        %v579 = vld [vmem:[#allocation8 + $0x130] sm:$0xff]
        %v580 = vld [vmem:[#allocation8 + $0x138] sm:$0xff]
        %v581 = vld [vmem:[#allocation8 + $0x140] sm:$0xff]
        %v582 = vld [vmem:[#allocation8 + $0x148] sm:$0xff]
        %v583 = vld [vmem:[#allocation8 + $0x150] sm:$0xff]
        %v584 = vld [vmem:[#allocation8 + $0x158] sm:$0xff]
        %v585 = vld [vmem:[#allocation8 + $0x160] sm:$0xff]
        %v586 = vld [vmem:[#allocation8 + $0x168] sm:$0xff]
        %v587 = vld [vmem:[#allocation8 + $0x170] sm:$0xff]
        %v588 = vld [vmem:[#allocation8 + $0x178] sm:$0xff]
        %v589 = vld [vmem:[#allocation8 + $0x180] sm:$0xff]
        %v590 = vld [vmem:[#allocation8 + $0x188] sm:$0xff]
        %v591 = vld [vmem:[#allocation8 + $0x190] sm:$0xff]
        %v592 = vld [vmem:[#allocation8 + $0x198] sm:$0xff]
        %v593 = vld [vmem:[#allocation8 + $0x1a0] sm:$0xff]
        %v594 = vld [vmem:[#allocation8 + $0x1a8] sm:$0xff]
        %v595 = vld [vmem:[#allocation8 + $0x1b0] sm:$0xff]
        %v596 = vld [vmem:[#allocation8 + $0x1b8] sm:$0xff]
        %v597 = vld [vmem:[#allocation8 + $0x1c0] sm:$0xff]
        %v598 = vld [vmem:[#allocation8 + $0x1c8] sm:$0xff]
        %v599 = vld [vmem:[#allocation8 + $0x1d0] sm:$0xff]
        %v600 = vld [vmem:[#allocation8 + $0x1d8] sm:$0xff]
        %v601 = vld [vmem:[#allocation8 + $0x1e0] sm:$0xff]
        %v602 = vld [vmem:[#allocation8 + $0x1e8] sm:$0xff]
        %v603 = vld [vmem:[#allocation8 + $0x1f0] sm:$0xff]
        %v604 = vld [vmem:[#allocation8 + $0x1f8] sm:$0xff]
        %v605 = vld [vmem:[#allocation8 + $0x200] sm:$0xff]
        %v606 = vld [vmem:[#allocation8 + $0x208] sm:$0xff]
        %v607 = vld [vmem:[#allocation8 + $0x210] sm:$0xff]
        %v608 = vld [vmem:[#allocation8 + $0x218] sm:$0xff]
        %v609 = vld [vmem:[#allocation8 + $0x220] sm:$0xff]
        %v610 = vld [vmem:[#allocation8 + $0x228] sm:$0xff]
        %v611 = vld [vmem:[#allocation8 + $0x230] sm:$0xff]
        %v612 = vld [vmem:[#allocation8 + $0x238] sm:$0xff]
        %v613 = vld [vmem:[#allocation8 + $0x240] sm:$0xff]
        %v614 = vld [vmem:[#allocation8 + $0x248] sm:$0xff]
        %v615 = vld [vmem:[#allocation8 + $0x250] sm:$0xff]
        %v616 = vld [vmem:[#allocation8 + $0x258] sm:$0xff]
        %v617 = vld [vmem:[#allocation8 + $0x260] sm:$0xff]
        %v618 = vld [vmem:[#allocation8 + $0x268] sm:$0xff]
        %v619 = vld [vmem:[#allocation8 + $0x270] sm:$0xff]
        %v620 = vld [vmem:[#allocation8 + $0x278] sm:$0xff]
        %v621 = vld [vmem:[#allocation8 + $0x280] sm:$0xff]
        %v622 = vld [vmem:[#allocation8 + $0x288] sm:$0xff]
        %v623 = vld [vmem:[#allocation8 + $0x290] sm:$0xff]
        %v624 = vld [vmem:[#allocation8 + $0x298] sm:$0xff]
        %v625 = vld [vmem:[#allocation8 + $0x2a0] sm:$0xff]
        %v626 = vld [vmem:[#allocation8 + $0x2a8] sm:$0xff]
        %v627 = vld [vmem:[#allocation8 + $0x2b0] sm:$0xff]
        %v628 = vld [vmem:[#allocation8 + $0x2b8] sm:$0xff]
        %v629 = vld [vmem:[#allocation8 + $0x2c0] sm:$0xff]
        %v630 = vld [vmem:[#allocation8 + $0x2c8] sm:$0xff]
        %v631 = vld [vmem:[#allocation8 + $0x2d0] sm:$0xff]
        %v632 = vld [vmem:[#allocation8 + $0x2d8] sm:$0xff]
        %v633 = vld [vmem:[#allocation8 + $0x2e0] sm:$0xff]
        %v634 = vld [vmem:[#allocation8 + $0x2e8] sm:$0xff]
        %v635 = vld [vmem:[#allocation8 + $0x2f0] sm:$0xff]
        %v636 = vld [vmem:[#allocation8 + $0x2f8] sm:$0xff]
        %v637 = vld [vmem:[#allocation8 + $0x300] sm:$0xff]
        %v638 = vld [vmem:[#allocation8 + $0x308] sm:$0xff]
        %v639 = vld [vmem:[#allocation8 + $0x310] sm:$0xff]
        %v640 = vld [vmem:[#allocation8 + $0x318] sm:$0xff]
        %v641 = vld [vmem:[#allocation8 + $0x320] sm:$0xff]
        %v642 = vld [vmem:[#allocation8 + $0x328] sm:$0xff]
        %v643 = vld [vmem:[#allocation8 + $0x330] sm:$0xff]
        %v644 = vld [vmem:[#allocation8 + $0x338] sm:$0xff]
        %v645 = vld [vmem:[#allocation8 + $0x340] sm:$0xff]
        %v646 = vld [vmem:[#allocation8 + $0x348] sm:$0xff]
        %v647 = vld [vmem:[#allocation8 + $0x350] sm:$0xff]
        %v648 = vld [vmem:[#allocation8 + $0x358] sm:$0xff]
        %v649 = vld [vmem:[#allocation8 + $0x360] sm:$0xff]
        %v650 = vld [vmem:[#allocation8 + $0x368] sm:$0xff]
        %v651 = vld [vmem:[#allocation8 + $0x370] sm:$0xff]
        %v652 = vld [vmem:[#allocation8 + $0x378] sm:$0xff]
        %v653 = vld [vmem:[#allocation8 + $0x380] sm:$0xff]
        %v654 = vld [vmem:[#allocation8 + $0x388] sm:$0xff]
        %v655 = vld [vmem:[#allocation8 + $0x390] sm:$0xff]
        %v656 = vld [vmem:[#allocation8 + $0x398] sm:$0xff]
        %v657 = vld [vmem:[#allocation8 + $0x3a0] sm:$0xff]
        %v658 = vld [vmem:[#allocation8 + $0x3a8] sm:$0xff]
        %v659 = vld [vmem:[#allocation8 + $0x3b0] sm:$0xff]
        %v660 = vld [vmem:[#allocation8 + $0x3b8] sm:$0xff]
        %v661 = vld [vmem:[#allocation8 + $0x3c0] sm:$0xff]
        %v662 = vld [vmem:[#allocation8 + $0x3c8] sm:$0xff]
        %v663 = vld [vmem:[#allocation8 + $0x3d0] sm:$0xff]
        %v664 = vld [vmem:[#allocation8 + $0x3d8] sm:$0xff]
        %v665 = vld [vmem:[#allocation8 + $0x3e0] sm:$0xff]
        %v666 = vld [vmem:[#allocation8 + $0x3e8] sm:$0xff]
        %v667 = vld [vmem:[#allocation8 + $0x3f0] sm:$0xff]
        %v668 = vld [vmem:[#allocation8 + $0x3f8] sm:$0xff]
        %v669 = vld [vmem:[#allocation8 + $0x400] sm:$0xff]
        %v670 = vld [vmem:[#allocation8 + $0x408] sm:$0xff]
        %v671 = vld [vmem:[#allocation8 + $0x410] sm:$0xff]
        %v672 = vld [vmem:[#allocation8 + $0x418] sm:$0xff]
        %v673 = vld [vmem:[#allocation8 + $0x420] sm:$0xff]
        %v674 = vld [vmem:[#allocation8 + $0x428] sm:$0xff]
        %v675 = vld [vmem:[#allocation8 + $0x430] sm:$0xff]
        %v676 = vld [vmem:[#allocation8 + $0x438] sm:$0xff]
        %v677 = vld [vmem:[#allocation8 + $0x440] sm:$0xff]
        %v678 = vld [vmem:[#allocation8 + $0x448] sm:$0xff]
        %v679 = vld [vmem:[#allocation8 + $0x450] sm:$0xff]
        %v680 = vld [vmem:[#allocation8 + $0x458] sm:$0xff]
        %v681 = vld [vmem:[#allocation8 + $0x460] sm:$0xff]
        %v682 = vld [vmem:[#allocation8 + $0x468] sm:$0xff]
        %v683 = vld [vmem:[#allocation8 + $0x470] sm:$0xff]
        %v684 = vld [vmem:[#allocation8 + $0x478] sm:$0xff]
        %v685 = vld [vmem:[#allocation8 + $0x480] sm:$0xff]
        %v686 = vld [vmem:[#allocation8 + $0x488] sm:$0xff]
        %v687 = vld [vmem:[#allocation8 + $0x490] sm:$0xff]
        %v688 = vld [vmem:[#allocation8 + $0x498] sm:$0xff]
        %v689 = vld [vmem:[#allocation8 + $0x4a0] sm:$0xff]
        %v690 = vld [vmem:[#allocation8 + $0x4a8] sm:$0xff]
        %v691 = vld [vmem:[#allocation8 + $0x4b0] sm:$0xff]
        %v692 = vld [vmem:[#allocation8 + $0x4b8] sm:$0xff]
        %v693 = vld [vmem:[#allocation8 + $0x4c0] sm:$0xff]
        %v694 = vld [vmem:[#allocation8 + $0x4c8] sm:$0xff]
        %v695 = vld [vmem:[#allocation8 + $0x4d0] sm:$0xff]
        %v696 = vld [vmem:[#allocation8 + $0x4d8] sm:$0xff]
        %v697 = vld [vmem:[#allocation8 + $0x4e0] sm:$0xff]
        %v698 = vld [vmem:[#allocation8 + $0x4e8] sm:$0xff]
        %v699 = vld [vmem:[#allocation8 + $0x4f0] sm:$0xff]
        %v700 = vld [vmem:[#allocation8 + $0x4f8] sm:$0xff]
        %v701 = vld [vmem:[#allocation8 + $0x500] sm:$0xff]
        %v702 = vld [vmem:[#allocation8 + $0x508] sm:$0xff]
        %v703 = vld [vmem:[#allocation8 + $0x510] sm:$0xff]
        %v704 = vld [vmem:[#allocation8 + $0x518] sm:$0xff]
        %v705 = vld [vmem:[#allocation8 + $0x520] sm:$0xff]
        %v706 = vld [vmem:[#allocation8 + $0x528] sm:$0xff]
        %v707 = vld [vmem:[#allocation8 + $0x530] sm:$0xff]
        %v708 = vld [vmem:[#allocation8 + $0x538] sm:$0xff]
        %v709 = vld [vmem:[#allocation8 + $0x540] sm:$0xff]
        %v710 = vld [vmem:[#allocation8 + $0x548] sm:$0xff]
        %v711 = vld [vmem:[#allocation8 + $0x550] sm:$0xff]
        %v712 = vld [vmem:[#allocation8 + $0x558] sm:$0xff]
        %v713 = vld [vmem:[#allocation8 + $0x560] sm:$0xff]
        %v714 = vld [vmem:[#allocation8 + $0x568] sm:$0xff]
        %v715 = vld [vmem:[#allocation8 + $0x570] sm:$0xff]
        %v716 = vld [vmem:[#allocation8 + $0x578] sm:$0xff]
        %v717 = vld [vmem:[#allocation8 + $0x580] sm:$0xff]
        %v718 = vld [vmem:[#allocation8 + $0x588] sm:$0xff]
        %v719 = vld [vmem:[#allocation8 + $0x590] sm:$0xff]
        %v720 = vld [vmem:[#allocation8 + $0x598] sm:$0xff]
        %v721 = vld [vmem:[#allocation8 + $0x5a0] sm:$0xff]
        %v722 = vld [vmem:[#allocation8 + $0x5a8] sm:$0xff]
        %v723 = vld [vmem:[#allocation8 + $0x5b0] sm:$0xff]
        %v724 = vld [vmem:[#allocation8 + $0x5b8] sm:$0xff]
        %v725 = vld [vmem:[#allocation8 + $0x5c0] sm:$0xff]
        %v726 = vld [vmem:[#allocation8 + $0x5c8] sm:$0xff]
        %v727 = vld [vmem:[#allocation8 + $0x5d0] sm:$0xff]
        %v728 = vld [vmem:[#allocation8 + $0x5d8] sm:$0xff]
        %v729 = vld [vmem:[#allocation8 + $0x5e0] sm:$0xff]
        %v730 = vld [vmem:[#allocation8 + $0x5e8] sm:$0xff]
        %v731 = vld [vmem:[#allocation8 + $0x5f0] sm:$0xff]
        %v732 = vld [vmem:[#allocation8 + $0x5f8] sm:$0xff]
        %v733 = vld [vmem:[#allocation8 + $0x600] sm:$0xff]
        %v734 = vld [vmem:[#allocation8 + $0x608] sm:$0xff]
        %v735 = vld [vmem:[#allocation8 + $0x610] sm:$0xff]
        %v736 = vld [vmem:[#allocation8 + $0x618] sm:$0xff]
        %v737 = vld [vmem:[#allocation8 + $0x620] sm:$0xff]
        %v738 = vld [vmem:[#allocation8 + $0x628] sm:$0xff]
        %v739 = vld [vmem:[#allocation8 + $0x630] sm:$0xff]
        %v740 = vld [vmem:[#allocation8 + $0x638] sm:$0xff]
        %v741 = vld [vmem:[#allocation8 + $0x640] sm:$0xff]
        %v742 = vld [vmem:[#allocation8 + $0x648] sm:$0xff]
        %v743 = vld [vmem:[#allocation8 + $0x650] sm:$0xff]
        %v744 = vld [vmem:[#allocation8 + $0x658] sm:$0xff]
        %v745 = vld [vmem:[#allocation8 + $0x660] sm:$0xff]
        %v746 = vld [vmem:[#allocation8 + $0x668] sm:$0xff]
        %v747 = vld [vmem:[#allocation8 + $0x670] sm:$0xff]
        %v748 = vld [vmem:[#allocation8 + $0x678] sm:$0xff]
        %v749 = vld [vmem:[#allocation8 + $0x680] sm:$0xff]
        %v750 = vld [vmem:[#allocation8 + $0x688] sm:$0xff]
        %v751 = vld [vmem:[#allocation8 + $0x690] sm:$0xff]
        %v752 = vld [vmem:[#allocation8 + $0x698] sm:$0xff]
        %v753 = vld [vmem:[#allocation8 + $0x6a0] sm:$0xff]
        %v754 = vld [vmem:[#allocation8 + $0x6a8] sm:$0xff]
        %v755 = vld [vmem:[#allocation8 + $0x6b0] sm:$0xff]
        %v756 = vld [vmem:[#allocation8 + $0x6b8] sm:$0xff]
        %v757 = vld [vmem:[#allocation8 + $0x6c0] sm:$0xff]
        %v758 = vld [vmem:[#allocation8 + $0x6c8] sm:$0xff]
        %v759 = vld [vmem:[#allocation8 + $0x6d0] sm:$0xff]
        %v760 = vld [vmem:[#allocation8 + $0x6d8] sm:$0xff]
        %v761 = vld [vmem:[#allocation8 + $0x6e0] sm:$0xff]
        %v762 = vld [vmem:[#allocation8 + $0x6e8] sm:$0xff]
        %v763 = vld [vmem:[#allocation8 + $0x6f0] sm:$0xff]
        %v764 = vld [vmem:[#allocation8 + $0x6f8] sm:$0xff]
        %v765 = vld [vmem:[#allocation8 + $0x700] sm:$0xff]
        %v766 = vld [vmem:[#allocation8 + $0x708] sm:$0xff]
        %v767 = vld [vmem:[#allocation8 + $0x710] sm:$0xff]
        %v768 = vld [vmem:[#allocation8 + $0x718] sm:$0xff]
        %v769 = vld [vmem:[#allocation8 + $0x720] sm:$0xff]
        %v770 = vld [vmem:[#allocation8 + $0x728] sm:$0xff]
        %v771 = vld [vmem:[#allocation8 + $0x730] sm:$0xff]
        %v772 = vld [vmem:[#allocation8 + $0x738] sm:$0xff]
        %v773 = vld [vmem:[#allocation8 + $0x740] sm:$0xff]
        %v774 = vld [vmem:[#allocation8 + $0x748] sm:$0xff]
        %v775 = vld [vmem:[#allocation8 + $0x750] sm:$0xff]
        %v776 = vld [vmem:[#allocation8 + $0x758] sm:$0xff]
        %v777 = vld [vmem:[#allocation8 + $0x760] sm:$0xff]
        %v778 = vld [vmem:[#allocation8 + $0x768] sm:$0xff]
        %v779 = vld [vmem:[#allocation8 + $0x770] sm:$0xff]
        %v780 = vld [vmem:[#allocation8 + $0x778] sm:$0xff]
        %v781 = vld [vmem:[#allocation8 + $0x780] sm:$0xff]
        %v782 = vld [vmem:[#allocation8 + $0x788] sm:$0xff]
        %v783 = vld [vmem:[#allocation8 + $0x790] sm:$0xff]
        %v784 = vld [vmem:[#allocation8 + $0x798] sm:$0xff]
        %v785 = vld [vmem:[#allocation8 + $0x7a0] sm:$0xff]
        %v786 = vld [vmem:[#allocation8 + $0x7a8] sm:$0xff]
        %v787 = vld [vmem:[#allocation8 + $0x7b0] sm:$0xff]
        %v788 = vld [vmem:[#allocation8 + $0x7b8] sm:$0xff]
        %v789 = vld [vmem:[#allocation8 + $0x7c0] sm:$0xff]
        %v790 = vld [vmem:[#allocation8 + $0x7c8] sm:$0xff]
        %v791 = vld [vmem:[#allocation8 + $0x7d0] sm:$0xff]
        %v792 = vld [vmem:[#allocation8 + $0x7d8] sm:$0xff]
        %v793 = vld [vmem:[#allocation8 + $0x7e0] sm:$0xff]
        %v794 = vld [vmem:[#allocation8 + $0x7e8] sm:$0xff]
        %v795 = vld [vmem:[#allocation8 + $0x7f0] sm:$0xff]
        %v796 = vld [vmem:[#allocation8 + $0x7f8] sm:$0xff]
        %v797 = vld [vmem:[#allocation10] sm:$0xf]
        %v799 = vperm.slane %v797, 0
        %v800 = vperm.slane %v797, 1
        %v801 = vperm.slane %v797, 2
        %v802 = vperm.slane %v797, 3
        %807 = vmatpush.msra.mxu0 %v601
        %808 = vmatpush.msra.mxu0 %v597
        %809 = vmatpush.msra.mxu0 %v593
        %810 = vmatpush.msra.mxu0 %v589
        %811 = vmatpush.msra.mxu0 %v585
        %812 = vmatpush.msra.mxu0 %v581
        %813 = vmatpush.msra.mxu0 %v577
        %814 = vmatpush.msra.mxu0 %v573
        %815 = vmatpush.msra.mxu0 %v569
        %816 = vmatpush.msra.mxu0 %v565
        %817 = vmatpush.msra.mxu0 %v561
        %818 = vmatpush.msra.mxu0 %v557
        %819 = vmatpush.msra.mxu0 %v553
        %820 = vmatpush.msra.mxu0 %v549
        %821 = vmatpush.msra.mxu0 %v545
        %822 = vmatpush.msra.mxu0 %v541
        %823 = vmatmul.f32.gmra.mxu0 %v537
        %v824 = vpop.f32.mrf.mxu0
        %v825 = vadd.f32 %v799, %v824
        %826 = vdwg.mxu0
        %827 = vmatpush.msra.mxu0 %v665
        %828 = vmatpush.msra.mxu0 %v661
        %829 = vmatpush.msra.mxu0 %v657
        %830 = vmatpush.msra.mxu0 %v653
        %831 = vmatpush.msra.mxu0 %v649
        %832 = vmatpush.msra.mxu0 %v645
        %833 = vmatpush.msra.mxu0 %v641
        %834 = vmatpush.msra.mxu0 %v637
        %835 = vmatpush.msra.mxu0 %v633
        %836 = vmatpush.msra.mxu0 %v629
        %837 = vmatpush.msra.mxu0 %v625
        %838 = vmatpush.msra.mxu0 %v621
        %839 = vmatpush.msra.mxu0 %v617
        %840 = vmatpush.msra.mxu0 %v613
        %841 = vmatpush.msra.mxu0 %v609
        %842 = vmatpush.msra.mxu0 %v605
        %843 = vmatmul.f32.gmra.mxu0 %v538
        %v844 = vpop.f32.mrf.mxu0
        %v845 = vadd.f32 %v825, %v844
        %846 = vdwg.mxu0
        %847 = vmatpush.msra.mxu0 %v729
        %848 = vmatpush.msra.mxu0 %v725
        %849 = vmatpush.msra.mxu0 %v721
        %850 = vmatpush.msra.mxu0 %v717
        %851 = vmatpush.msra.mxu0 %v713
        %852 = vmatpush.msra.mxu0 %v709
        %853 = vmatpush.msra.mxu0 %v705
        %854 = vmatpush.msra.mxu0 %v701
        %855 = vmatpush.msra.mxu0 %v697
        %856 = vmatpush.msra.mxu0 %v693
        %857 = vmatpush.msra.mxu0 %v689
        %858 = vmatpush.msra.mxu0 %v685
        %859 = vmatpush.msra.mxu0 %v681
        %860 = vmatpush.msra.mxu0 %v677
        %861 = vmatpush.msra.mxu0 %v673
        %862 = vmatpush.msra.mxu0 %v669
        %863 = vmatmul.f32.gmra.mxu0 %v539
        %v864 = vpop.f32.mrf.mxu0
        %v865 = vadd.f32 %v845, %v864
        %866 = vdwg.mxu0
        %867 = vmatpush.msra.mxu0 %v793
        %868 = vmatpush.msra.mxu0 %v789
        %869 = vmatpush.msra.mxu0 %v785
        %870 = vmatpush.msra.mxu0 %v781
        %871 = vmatpush.msra.mxu0 %v777
        %872 = vmatpush.msra.mxu0 %v773
        %873 = vmatpush.msra.mxu0 %v769
        %874 = vmatpush.msra.mxu0 %v765
        %875 = vmatpush.msra.mxu0 %v761
        %876 = vmatpush.msra.mxu0 %v757
        %877 = vmatpush.msra.mxu0 %v753
        %878 = vmatpush.msra.mxu0 %v749
        %879 = vmatpush.msra.mxu0 %v745
        %880 = vmatpush.msra.mxu0 %v741
        %881 = vmatpush.msra.mxu0 %v737
        %882 = vmatpush.msra.mxu0 %v733
        %883 = vmatmul.f32.gmra.mxu0 %v540
        %v884 = vpop.f32.mrf.mxu0
        %v885 = vadd.f32 %v865, %v884
        %886 = vdwg.mxu0
        %887 = vmatpush.msra.mxu0 %v602
        %888 = vmatpush.msra.mxu0 %v598
        %889 = vmatpush.msra.mxu0 %v594
        %890 = vmatpush.msra.mxu0 %v590
        %891 = vmatpush.msra.mxu0 %v586
        %892 = vmatpush.msra.mxu0 %v582
        %893 = vmatpush.msra.mxu0 %v578
        %894 = vmatpush.msra.mxu0 %v574
        %895 = vmatpush.msra.mxu0 %v570
        %896 = vmatpush.msra.mxu0 %v566
        %897 = vmatpush.msra.mxu0 %v562
        %898 = vmatpush.msra.mxu0 %v558
        %899 = vmatpush.msra.mxu0 %v554
        %900 = vmatpush.msra.mxu0 %v550
        %901 = vmatpush.msra.mxu0 %v546
        %902 = vmatpush.msra.mxu0 %v542
        %903 = vmatmul.f32.gmra.mxu0 %v537
        %v904 = vpop.f32.mrf.mxu0
        %v905 = vadd.f32 %v800, %v904
        %906 = vdwg.mxu0
        %907 = vmatpush.msra.mxu0 %v666
        %908 = vmatpush.msra.mxu0 %v662
        %909 = vmatpush.msra.mxu0 %v658
        %910 = vmatpush.msra.mxu0 %v654
        %911 = vmatpush.msra.mxu0 %v650
        %912 = vmatpush.msra.mxu0 %v646
        %913 = vmatpush.msra.mxu0 %v642
        %914 = vmatpush.msra.mxu0 %v638
        %915 = vmatpush.msra.mxu0 %v634
        %916 = vmatpush.msra.mxu0 %v630
        %917 = vmatpush.msra.mxu0 %v626
        %918 = vmatpush.msra.mxu0 %v622
        %919 = vmatpush.msra.mxu0 %v618
        %920 = vmatpush.msra.mxu0 %v614
        %921 = vmatpush.msra.mxu0 %v610
        %922 = vmatpush.msra.mxu0 %v606
        %923 = vmatmul.f32.gmra.mxu0 %v538
        %v924 = vpop.f32.mrf.mxu0
        %v925 = vadd.f32 %v905, %v924
        %926 = vdwg.mxu0
        %927 = vmatpush.msra.mxu0 %v730
        %928 = vmatpush.msra.mxu0 %v726
        %929 = vmatpush.msra.mxu0 %v722
        %930 = vmatpush.msra.mxu0 %v718
        %931 = vmatpush.msra.mxu0 %v714
        %932 = vmatpush.msra.mxu0 %v710
        %933 = vmatpush.msra.mxu0 %v706
        %934 = vmatpush.msra.mxu0 %v702
        %935 = vmatpush.msra.mxu0 %v698
        %936 = vmatpush.msra.mxu0 %v694
        %937 = vmatpush.msra.mxu0 %v690
        %938 = vmatpush.msra.mxu0 %v686
        %939 = vmatpush.msra.mxu0 %v682
        %940 = vmatpush.msra.mxu0 %v678
        %941 = vmatpush.msra.mxu0 %v674
        %942 = vmatpush.msra.mxu0 %v670
        %943 = vmatmul.f32.gmra.mxu0 %v539
        %v944 = vpop.f32.mrf.mxu0
        %v945 = vadd.f32 %v925, %v944
        %946 = vdwg.mxu0
        %947 = vmatpush.msra.mxu0 %v794
        %948 = vmatpush.msra.mxu0 %v790
        %949 = vmatpush.msra.mxu0 %v786
        %950 = vmatpush.msra.mxu0 %v782
        %951 = vmatpush.msra.mxu0 %v778
        %952 = vmatpush.msra.mxu0 %v774
        %953 = vmatpush.msra.mxu0 %v770
        %954 = vmatpush.msra.mxu0 %v766
        %955 = vmatpush.msra.mxu0 %v762
        %956 = vmatpush.msra.mxu0 %v758
        %957 = vmatpush.msra.mxu0 %v754
        %958 = vmatpush.msra.mxu0 %v750
        %959 = vmatpush.msra.mxu0 %v746
        %960 = vmatpush.msra.mxu0 %v742
        %961 = vmatpush.msra.mxu0 %v738
        %962 = vmatpush.msra.mxu0 %v734
        %963 = vmatmul.f32.gmra.mxu0 %v540
        %v964 = vpop.f32.mrf.mxu0
        %v965 = vadd.f32 %v945, %v964
        %966 = vdwg.mxu0
        %967 = vmatpush.msra.mxu0 %v603
        %968 = vmatpush.msra.mxu0 %v599
        %969 = vmatpush.msra.mxu0 %v595
        %970 = vmatpush.msra.mxu0 %v591
        %971 = vmatpush.msra.mxu0 %v587
        %972 = vmatpush.msra.mxu0 %v583
        %973 = vmatpush.msra.mxu0 %v579
        %974 = vmatpush.msra.mxu0 %v575
        %975 = vmatpush.msra.mxu0 %v571
        %976 = vmatpush.msra.mxu0 %v567
        %977 = vmatpush.msra.mxu0 %v563
        %978 = vmatpush.msra.mxu0 %v559
        %979 = vmatpush.msra.mxu0 %v555
        %980 = vmatpush.msra.mxu0 %v551
        %981 = vmatpush.msra.mxu0 %v547
        %982 = vmatpush.msra.mxu0 %v543
        %983 = vmatmul.f32.gmra.mxu0 %v537
        %v984 = vpop.f32.mrf.mxu0
        %v985 = vadd.f32 %v801, %v984
        %986 = vdwg.mxu0
        %987 = vmatpush.msra.mxu0 %v667
        %988 = vmatpush.msra.mxu0 %v663
        %989 = vmatpush.msra.mxu0 %v659
        %990 = vmatpush.msra.mxu0 %v655
        %991 = vmatpush.msra.mxu0 %v651
        %992 = vmatpush.msra.mxu0 %v647
        %993 = vmatpush.msra.mxu0 %v643
        %994 = vmatpush.msra.mxu0 %v639
        %995 = vmatpush.msra.mxu0 %v635
        %996 = vmatpush.msra.mxu0 %v631
        %997 = vmatpush.msra.mxu0 %v627
        %998 = vmatpush.msra.mxu0 %v623
        %999 = vmatpush.msra.mxu0 %v619
        %1000 = vmatpush.msra.mxu0 %v615
        %1001 = vmatpush.msra.mxu0 %v611
        %1002 = vmatpush.msra.mxu0 %v607
        %1003 = vmatmul.f32.gmra.mxu0 %v538
        %v1004 = vpop.f32.mrf.mxu0
        %v1005 = vadd.f32 %v985, %v1004
        %1006 = vdwg.mxu0
        %1007 = vmatpush.msra.mxu0 %v731
        %1008 = vmatpush.msra.mxu0 %v727
        %1009 = vmatpush.msra.mxu0 %v723
        %1010 = vmatpush.msra.mxu0 %v719
        %1011 = vmatpush.msra.mxu0 %v715
        %1012 = vmatpush.msra.mxu0 %v711
        %1013 = vmatpush.msra.mxu0 %v707
        %1014 = vmatpush.msra.mxu0 %v703
        %1015 = vmatpush.msra.mxu0 %v699
        %1016 = vmatpush.msra.mxu0 %v695
        %1017 = vmatpush.msra.mxu0 %v691
        %1018 = vmatpush.msra.mxu0 %v687
        %1019 = vmatpush.msra.mxu0 %v683
        %1020 = vmatpush.msra.mxu0 %v679
        %1021 = vmatpush.msra.mxu0 %v675
        %1022 = vmatpush.msra.mxu0 %v671
        %1023 = vmatmul.f32.gmra.mxu0 %v539
        %v1024 = vpop.f32.mrf.mxu0
        %v1025 = vadd.f32 %v1005, %v1024
        %1026 = vdwg.mxu0
        %1027 = vmatpush.msra.mxu0 %v795
        %1028 = vmatpush.msra.mxu0 %v791
        %1029 = vmatpush.msra.mxu0 %v787
        %1030 = vmatpush.msra.mxu0 %v783
        %1031 = vmatpush.msra.mxu0 %v779
        %1032 = vmatpush.msra.mxu0 %v775
        %1033 = vmatpush.msra.mxu0 %v771
        %1034 = vmatpush.msra.mxu0 %v767
        %1035 = vmatpush.msra.mxu0 %v763
        %1036 = vmatpush.msra.mxu0 %v759
        %1037 = vmatpush.msra.mxu0 %v755
        %1038 = vmatpush.msra.mxu0 %v751
        %1039 = vmatpush.msra.mxu0 %v747
        %1040 = vmatpush.msra.mxu0 %v743
        %1041 = vmatpush.msra.mxu0 %v739
        %1042 = vmatpush.msra.mxu0 %v735
        %1043 = vmatmul.f32.gmra.mxu0 %v540
        %v1044 = vpop.f32.mrf.mxu0
        %v1045 = vadd.f32 %v1025, %v1044
        %1046 = vdwg.mxu0
        %1047 = vmatpush.msra.mxu0 %v604
        %1048 = vmatpush.msra.mxu0 %v600
        %1049 = vmatpush.msra.mxu0 %v596
        %1050 = vmatpush.msra.mxu0 %v592
        %1051 = vmatpush.msra.mxu0 %v588
        %1052 = vmatpush.msra.mxu0 %v584
        %1053 = vmatpush.msra.mxu0 %v580
        %1054 = vmatpush.msra.mxu0 %v576
        %1055 = vmatpush.msra.mxu0 %v572
        %1056 = vmatpush.msra.mxu0 %v568
        %1057 = vmatpush.msra.mxu0 %v564
        %1058 = vmatpush.msra.mxu0 %v560
        %1059 = vmatpush.msra.mxu0 %v556
        %1060 = vmatpush.msra.mxu0 %v552
        %1061 = vmatpush.msra.mxu0 %v548
        %1062 = vmatpush.msra.mxu0 %v544
        %1063 = vmatmul.f32.gmra.mxu0 %v537
        %v1064 = vpop.f32.mrf.mxu0
        %v1065 = vadd.f32 %v802, %v1064
        %1066 = vdwg.mxu0
        %1067 = vmatpush.msra.mxu0 %v668
        %1068 = vmatpush.msra.mxu0 %v664
        %1069 = vmatpush.msra.mxu0 %v660
        %1070 = vmatpush.msra.mxu0 %v656
        %1071 = vmatpush.msra.mxu0 %v652
        %1072 = vmatpush.msra.mxu0 %v648
        %1073 = vmatpush.msra.mxu0 %v644
        %1074 = vmatpush.msra.mxu0 %v640
        %1075 = vmatpush.msra.mxu0 %v636
        %1076 = vmatpush.msra.mxu0 %v632
        %1077 = vmatpush.msra.mxu0 %v628
        %1078 = vmatpush.msra.mxu0 %v624
        %1079 = vmatpush.msra.mxu0 %v620
        %1080 = vmatpush.msra.mxu0 %v616
        %1081 = vmatpush.msra.mxu0 %v612
        %1082 = vmatpush.msra.mxu0 %v608
        %1083 = vmatmul.f32.gmra.mxu0 %v538
        %v1084 = vpop.f32.mrf.mxu0
        %v1085 = vadd.f32 %v1065, %v1084
        %1086 = vdwg.mxu0
        %1087 = vmatpush.msra.mxu0 %v732
        %1088 = vmatpush.msra.mxu0 %v728
        %1089 = vmatpush.msra.mxu0 %v724
        %1090 = vmatpush.msra.mxu0 %v720
        %1091 = vmatpush.msra.mxu0 %v716
        %1092 = vmatpush.msra.mxu0 %v712
        %1093 = vmatpush.msra.mxu0 %v708
        %1094 = vmatpush.msra.mxu0 %v704
        %1095 = vmatpush.msra.mxu0 %v700
        %1096 = vmatpush.msra.mxu0 %v696
        %1097 = vmatpush.msra.mxu0 %v692
        %1098 = vmatpush.msra.mxu0 %v688
        %1099 = vmatpush.msra.mxu0 %v684
        %1100 = vmatpush.msra.mxu0 %v680
        %1101 = vmatpush.msra.mxu0 %v676
        %1102 = vmatpush.msra.mxu0 %v672
        %1103 = vmatmul.f32.gmra.mxu0 %v539
        %v1104 = vpop.f32.mrf.mxu0
        %v1105 = vadd.f32 %v1085, %v1104
        %1106 = vdwg.mxu0
        %1107 = vmatpush.msra.mxu0 %v796
        %1108 = vmatpush.msra.mxu0 %v792
        %1109 = vmatpush.msra.mxu0 %v788
        %1110 = vmatpush.msra.mxu0 %v784
        %1111 = vmatpush.msra.mxu0 %v780
        %1112 = vmatpush.msra.mxu0 %v776
        %1113 = vmatpush.msra.mxu0 %v772
        %1114 = vmatpush.msra.mxu0 %v768
        %1115 = vmatpush.msra.mxu0 %v764
        %1116 = vmatpush.msra.mxu0 %v760
        %1117 = vmatpush.msra.mxu0 %v756
        %1118 = vmatpush.msra.mxu0 %v752
        %1119 = vmatpush.msra.mxu0 %v748
        %1120 = vmatpush.msra.mxu0 %v744
        %1121 = vmatpush.msra.mxu0 %v740
        %1122 = vmatpush.msra.mxu0 %v736
        %1123 = vmatmul.f32.gmra.mxu0 %v540
        %v1124 = vpop.f32.mrf.mxu0
        %v1125 = vadd.f32 %v1105, %v1124
        %1126 = vdwg.mxu0
        %v1127 = vmax.f32 %v885, 0.0
        %v1128 = vmax.f32 %v965, 0.0
        %v1129 = vmax.f32 %v1045, 0.0
        %v1130 = vmax.f32 %v1125, 0.0
        %v1131 = vld [vmem:[#allocation11] sm:$0xff]
        %v1132 = vld [vmem:[#allocation11 + $0x8] sm:$0xff]
        %v1133 = vld [vmem:[#allocation11 + $0x10] sm:$0xff]
        %v1134 = vld [vmem:[#allocation11 + $0x18] sm:$0xff]
        %v1135 = vld [vmem:[#allocation11 + $0x20] sm:$0xff]
        %v1136 = vld [vmem:[#allocation11 + $0x28] sm:$0xff]
        %v1137 = vld [vmem:[#allocation11 + $0x30] sm:$0xff]
        %v1138 = vld [vmem:[#allocation11 + $0x38] sm:$0xff]
        %v1139 = vld [vmem:[#allocation11 + $0x40] sm:$0xff]
        %v1140 = vld [vmem:[#allocation11 + $0x48] sm:$0xff]
        %v1141 = vld [vmem:[#allocation11 + $0x50] sm:$0xff]
        %v1142 = vld [vmem:[#allocation11 + $0x58] sm:$0xff]
        %v1143 = vld [vmem:[#allocation11 + $0x60] sm:$0xff]
        %v1144 = vld [vmem:[#allocation11 + $0x68] sm:$0xff]
        %v1145 = vld [vmem:[#allocation11 + $0x70] sm:$0xff]
        %v1146 = vld [vmem:[#allocation11 + $0x78] sm:$0xff]
        %v1147 = vld [vmem:[#allocation11 + $0x80] sm:$0xff]
        %v1148 = vld [vmem:[#allocation11 + $0x88] sm:$0xff]
        %v1149 = vld [vmem:[#allocation11 + $0x90] sm:$0xff]
        %v1150 = vld [vmem:[#allocation11 + $0x98] sm:$0xff]
        %v1151 = vld [vmem:[#allocation11 + $0xa0] sm:$0xff]
        %v1152 = vld [vmem:[#allocation11 + $0xa8] sm:$0xff]
        %v1153 = vld [vmem:[#allocation11 + $0xb0] sm:$0xff]
        %v1154 = vld [vmem:[#allocation11 + $0xb8] sm:$0xff]
        %v1155 = vld [vmem:[#allocation11 + $0xc0] sm:$0xff]
        %v1156 = vld [vmem:[#allocation11 + $0xc8] sm:$0xff]
        %v1157 = vld [vmem:[#allocation11 + $0xd0] sm:$0xff]
        %v1158 = vld [vmem:[#allocation11 + $0xd8] sm:$0xff]
        %v1159 = vld [vmem:[#allocation11 + $0xe0] sm:$0xff]
        %v1160 = vld [vmem:[#allocation11 + $0xe8] sm:$0xff]
        %v1161 = vld [vmem:[#allocation11 + $0xf0] sm:$0xff]
        %v1162 = vld [vmem:[#allocation11 + $0xf8] sm:$0xff]
        %v1163 = vld [vmem:[#allocation11 + $0x100] sm:$0xff]
        %v1164 = vld [vmem:[#allocation11 + $0x108] sm:$0xff]
        %v1165 = vld [vmem:[#allocation11 + $0x110] sm:$0xff]
        %v1166 = vld [vmem:[#allocation11 + $0x118] sm:$0xff]
        %v1167 = vld [vmem:[#allocation11 + $0x120] sm:$0xff]
        %v1168 = vld [vmem:[#allocation11 + $0x128] sm:$0xff]
        %v1169 = vld [vmem:[#allocation11 + $0x130] sm:$0xff]
        %v1170 = vld [vmem:[#allocation11 + $0x138] sm:$0xff]
        %v1171 = vld [vmem:[#allocation11 + $0x140] sm:$0xff]
        %v1172 = vld [vmem:[#allocation11 + $0x148] sm:$0xff]
        %v1173 = vld [vmem:[#allocation11 + $0x150] sm:$0xff]
        %v1174 = vld [vmem:[#allocation11 + $0x158] sm:$0xff]
        %v1175 = vld [vmem:[#allocation11 + $0x160] sm:$0xff]
        %v1176 = vld [vmem:[#allocation11 + $0x168] sm:$0xff]
        %v1177 = vld [vmem:[#allocation11 + $0x170] sm:$0xff]
        %v1178 = vld [vmem:[#allocation11 + $0x178] sm:$0xff]
        %v1179 = vld [vmem:[#allocation11 + $0x180] sm:$0xff]
        %v1180 = vld [vmem:[#allocation11 + $0x188] sm:$0xff]
        %v1181 = vld [vmem:[#allocation11 + $0x190] sm:$0xff]
        %v1182 = vld [vmem:[#allocation11 + $0x198] sm:$0xff]
        %v1183 = vld [vmem:[#allocation11 + $0x1a0] sm:$0xff]
        %v1184 = vld [vmem:[#allocation11 + $0x1a8] sm:$0xff]
        %v1185 = vld [vmem:[#allocation11 + $0x1b0] sm:$0xff]
        %v1186 = vld [vmem:[#allocation11 + $0x1b8] sm:$0xff]
        %v1187 = vld [vmem:[#allocation11 + $0x1c0] sm:$0xff]
        %v1188 = vld [vmem:[#allocation11 + $0x1c8] sm:$0xff]
        %v1189 = vld [vmem:[#allocation11 + $0x1d0] sm:$0xff]
        %v1190 = vld [vmem:[#allocation11 + $0x1d8] sm:$0xff]
        %v1191 = vld [vmem:[#allocation11 + $0x1e0] sm:$0xff]
        %v1192 = vld [vmem:[#allocation11 + $0x1e8] sm:$0xff]
        %v1193 = vld [vmem:[#allocation11 + $0x1f0] sm:$0xff]
        %v1194 = vld [vmem:[#allocation11 + $0x1f8] sm:$0xff]
        %v1195 = vld [vmem:[#allocation11 + $0x200] sm:$0xff]
        %v1196 = vld [vmem:[#allocation11 + $0x208] sm:$0xff]
        %v1197 = vld [vmem:[#allocation11 + $0x210] sm:$0xff]
        %v1198 = vld [vmem:[#allocation11 + $0x218] sm:$0xff]
        %v1199 = vld [vmem:[#allocation11 + $0x220] sm:$0xff]
        %v1200 = vld [vmem:[#allocation11 + $0x228] sm:$0xff]
        %v1201 = vld [vmem:[#allocation11 + $0x230] sm:$0xff]
        %v1202 = vld [vmem:[#allocation11 + $0x238] sm:$0xff]
        %v1203 = vld [vmem:[#allocation11 + $0x240] sm:$0xff]
        %v1204 = vld [vmem:[#allocation11 + $0x248] sm:$0xff]
        %v1205 = vld [vmem:[#allocation11 + $0x250] sm:$0xff]
        %v1206 = vld [vmem:[#allocation11 + $0x258] sm:$0xff]
        %v1207 = vld [vmem:[#allocation11 + $0x260] sm:$0xff]
        %v1208 = vld [vmem:[#allocation11 + $0x268] sm:$0xff]
        %v1209 = vld [vmem:[#allocation11 + $0x270] sm:$0xff]
        %v1210 = vld [vmem:[#allocation11 + $0x278] sm:$0xff]
        %v1211 = vld [vmem:[#allocation11 + $0x280] sm:$0xff]
        %v1212 = vld [vmem:[#allocation11 + $0x288] sm:$0xff]
        %v1213 = vld [vmem:[#allocation11 + $0x290] sm:$0xff]
        %v1214 = vld [vmem:[#allocation11 + $0x298] sm:$0xff]
        %v1215 = vld [vmem:[#allocation11 + $0x2a0] sm:$0xff]
        %v1216 = vld [vmem:[#allocation11 + $0x2a8] sm:$0xff]
        %v1217 = vld [vmem:[#allocation11 + $0x2b0] sm:$0xff]
        %v1218 = vld [vmem:[#allocation11 + $0x2b8] sm:$0xff]
        %v1219 = vld [vmem:[#allocation11 + $0x2c0] sm:$0xff]
        %v1220 = vld [vmem:[#allocation11 + $0x2c8] sm:$0xff]
        %v1221 = vld [vmem:[#allocation11 + $0x2d0] sm:$0xff]
        %v1222 = vld [vmem:[#allocation11 + $0x2d8] sm:$0xff]
        %v1223 = vld [vmem:[#allocation11 + $0x2e0] sm:$0xff]
        %v1224 = vld [vmem:[#allocation11 + $0x2e8] sm:$0xff]
        %v1225 = vld [vmem:[#allocation11 + $0x2f0] sm:$0xff]
        %v1226 = vld [vmem:[#allocation11 + $0x2f8] sm:$0xff]
        %v1227 = vld [vmem:[#allocation11 + $0x300] sm:$0xff]
        %v1228 = vld [vmem:[#allocation11 + $0x308] sm:$0xff]
        %v1229 = vld [vmem:[#allocation11 + $0x310] sm:$0xff]
        %v1230 = vld [vmem:[#allocation11 + $0x318] sm:$0xff]
        %v1231 = vld [vmem:[#allocation11 + $0x320] sm:$0xff]
        %v1232 = vld [vmem:[#allocation11 + $0x328] sm:$0xff]
        %v1233 = vld [vmem:[#allocation11 + $0x330] sm:$0xff]
        %v1234 = vld [vmem:[#allocation11 + $0x338] sm:$0xff]
        %v1235 = vld [vmem:[#allocation11 + $0x340] sm:$0xff]
        %v1236 = vld [vmem:[#allocation11 + $0x348] sm:$0xff]
        %v1237 = vld [vmem:[#allocation11 + $0x350] sm:$0xff]
        %v1238 = vld [vmem:[#allocation11 + $0x358] sm:$0xff]
        %v1239 = vld [vmem:[#allocation11 + $0x360] sm:$0xff]
        %v1240 = vld [vmem:[#allocation11 + $0x368] sm:$0xff]
        %v1241 = vld [vmem:[#allocation11 + $0x370] sm:$0xff]
        %v1242 = vld [vmem:[#allocation11 + $0x378] sm:$0xff]
        %v1243 = vld [vmem:[#allocation11 + $0x380] sm:$0xff]
        %v1244 = vld [vmem:[#allocation11 + $0x388] sm:$0xff]
        %v1245 = vld [vmem:[#allocation11 + $0x390] sm:$0xff]
        %v1246 = vld [vmem:[#allocation11 + $0x398] sm:$0xff]
        %v1247 = vld [vmem:[#allocation11 + $0x3a0] sm:$0xff]
        %v1248 = vld [vmem:[#allocation11 + $0x3a8] sm:$0xff]
        %v1249 = vld [vmem:[#allocation11 + $0x3b0] sm:$0xff]
        %v1250 = vld [vmem:[#allocation11 + $0x3b8] sm:$0xff]
        %v1251 = vld [vmem:[#allocation11 + $0x3c0] sm:$0xff]
        %v1252 = vld [vmem:[#allocation11 + $0x3c8] sm:$0xff]
        %v1253 = vld [vmem:[#allocation11 + $0x3d0] sm:$0xff]
        %v1254 = vld [vmem:[#allocation11 + $0x3d8] sm:$0xff]
        %v1255 = vld [vmem:[#allocation11 + $0x3e0] sm:$0xff]
        %v1256 = vld [vmem:[#allocation11 + $0x3e8] sm:$0xff]
        %v1257 = vld [vmem:[#allocation11 + $0x3f0] sm:$0xff]
        %v1258 = vld [vmem:[#allocation11 + $0x3f8] sm:$0xff]
        %v1259 = vld [vmem:[#allocation11 + $0x400] sm:$0xff]
        %v1260 = vld [vmem:[#allocation11 + $0x408] sm:$0xff]
        %v1261 = vld [vmem:[#allocation11 + $0x410] sm:$0xff]
        %v1262 = vld [vmem:[#allocation11 + $0x418] sm:$0xff]
        %v1263 = vld [vmem:[#allocation11 + $0x420] sm:$0xff]
        %v1264 = vld [vmem:[#allocation11 + $0x428] sm:$0xff]
        %v1265 = vld [vmem:[#allocation11 + $0x430] sm:$0xff]
        %v1266 = vld [vmem:[#allocation11 + $0x438] sm:$0xff]
        %v1267 = vld [vmem:[#allocation11 + $0x440] sm:$0xff]
        %v1268 = vld [vmem:[#allocation11 + $0x448] sm:$0xff]
        %v1269 = vld [vmem:[#allocation11 + $0x450] sm:$0xff]
        %v1270 = vld [vmem:[#allocation11 + $0x458] sm:$0xff]
        %v1271 = vld [vmem:[#allocation11 + $0x460] sm:$0xff]
        %v1272 = vld [vmem:[#allocation11 + $0x468] sm:$0xff]
        %v1273 = vld [vmem:[#allocation11 + $0x470] sm:$0xff]
        %v1274 = vld [vmem:[#allocation11 + $0x478] sm:$0xff]
        %v1275 = vld [vmem:[#allocation11 + $0x480] sm:$0xff]
        %v1276 = vld [vmem:[#allocation11 + $0x488] sm:$0xff]
        %v1277 = vld [vmem:[#allocation11 + $0x490] sm:$0xff]
        %v1278 = vld [vmem:[#allocation11 + $0x498] sm:$0xff]
        %v1279 = vld [vmem:[#allocation11 + $0x4a0] sm:$0xff]
        %v1280 = vld [vmem:[#allocation11 + $0x4a8] sm:$0xff]
        %v1281 = vld [vmem:[#allocation11 + $0x4b0] sm:$0xff]
        %v1282 = vld [vmem:[#allocation11 + $0x4b8] sm:$0xff]
        %v1283 = vld [vmem:[#allocation11 + $0x4c0] sm:$0xff]
        %v1284 = vld [vmem:[#allocation11 + $0x4c8] sm:$0xff]
        %v1285 = vld [vmem:[#allocation11 + $0x4d0] sm:$0xff]
        %v1286 = vld [vmem:[#allocation11 + $0x4d8] sm:$0xff]
        %v1287 = vld [vmem:[#allocation11 + $0x4e0] sm:$0xff]
        %v1288 = vld [vmem:[#allocation11 + $0x4e8] sm:$0xff]
        %v1289 = vld [vmem:[#allocation11 + $0x4f0] sm:$0xff]
        %v1290 = vld [vmem:[#allocation11 + $0x4f8] sm:$0xff]
        %v1291 = vld [vmem:[#allocation11 + $0x500] sm:$0xff]
        %v1292 = vld [vmem:[#allocation11 + $0x508] sm:$0xff]
        %v1293 = vld [vmem:[#allocation11 + $0x510] sm:$0xff]
        %v1294 = vld [vmem:[#allocation11 + $0x518] sm:$0xff]
        %v1295 = vld [vmem:[#allocation11 + $0x520] sm:$0xff]
        %v1296 = vld [vmem:[#allocation11 + $0x528] sm:$0xff]
        %v1297 = vld [vmem:[#allocation11 + $0x530] sm:$0xff]
        %v1298 = vld [vmem:[#allocation11 + $0x538] sm:$0xff]
        %v1299 = vld [vmem:[#allocation11 + $0x540] sm:$0xff]
        %v1300 = vld [vmem:[#allocation11 + $0x548] sm:$0xff]
        %v1301 = vld [vmem:[#allocation11 + $0x550] sm:$0xff]
        %v1302 = vld [vmem:[#allocation11 + $0x558] sm:$0xff]
        %v1303 = vld [vmem:[#allocation11 + $0x560] sm:$0xff]
        %v1304 = vld [vmem:[#allocation11 + $0x568] sm:$0xff]
        %v1305 = vld [vmem:[#allocation11 + $0x570] sm:$0xff]
        %v1306 = vld [vmem:[#allocation11 + $0x578] sm:$0xff]
        %v1307 = vld [vmem:[#allocation11 + $0x580] sm:$0xff]
        %v1308 = vld [vmem:[#allocation11 + $0x588] sm:$0xff]
        %v1309 = vld [vmem:[#allocation11 + $0x590] sm:$0xff]
        %v1310 = vld [vmem:[#allocation11 + $0x598] sm:$0xff]
        %v1311 = vld [vmem:[#allocation11 + $0x5a0] sm:$0xff]
        %v1312 = vld [vmem:[#allocation11 + $0x5a8] sm:$0xff]
        %v1313 = vld [vmem:[#allocation11 + $0x5b0] sm:$0xff]
        %v1314 = vld [vmem:[#allocation11 + $0x5b8] sm:$0xff]
        %v1315 = vld [vmem:[#allocation11 + $0x5c0] sm:$0xff]
        %v1316 = vld [vmem:[#allocation11 + $0x5c8] sm:$0xff]
        %v1317 = vld [vmem:[#allocation11 + $0x5d0] sm:$0xff]
        %v1318 = vld [vmem:[#allocation11 + $0x5d8] sm:$0xff]
        %v1319 = vld [vmem:[#allocation11 + $0x5e0] sm:$0xff]
        %v1320 = vld [vmem:[#allocation11 + $0x5e8] sm:$0xff]
        %v1321 = vld [vmem:[#allocation11 + $0x5f0] sm:$0xff]
        %v1322 = vld [vmem:[#allocation11 + $0x5f8] sm:$0xff]
        %v1323 = vld [vmem:[#allocation11 + $0x600] sm:$0xff]
        %v1324 = vld [vmem:[#allocation11 + $0x608] sm:$0xff]
        %v1325 = vld [vmem:[#allocation11 + $0x610] sm:$0xff]
        %v1326 = vld [vmem:[#allocation11 + $0x618] sm:$0xff]
        %v1327 = vld [vmem:[#allocation11 + $0x620] sm:$0xff]
        %v1328 = vld [vmem:[#allocation11 + $0x628] sm:$0xff]
        %v1329 = vld [vmem:[#allocation11 + $0x630] sm:$0xff]
        %v1330 = vld [vmem:[#allocation11 + $0x638] sm:$0xff]
        %v1331 = vld [vmem:[#allocation11 + $0x640] sm:$0xff]
        %v1332 = vld [vmem:[#allocation11 + $0x648] sm:$0xff]
        %v1333 = vld [vmem:[#allocation11 + $0x650] sm:$0xff]
        %v1334 = vld [vmem:[#allocation11 + $0x658] sm:$0xff]
        %v1335 = vld [vmem:[#allocation11 + $0x660] sm:$0xff]
        %v1336 = vld [vmem:[#allocation11 + $0x668] sm:$0xff]
        %v1337 = vld [vmem:[#allocation11 + $0x670] sm:$0xff]
        %v1338 = vld [vmem:[#allocation11 + $0x678] sm:$0xff]
        %v1339 = vld [vmem:[#allocation11 + $0x680] sm:$0xff]
        %v1340 = vld [vmem:[#allocation11 + $0x688] sm:$0xff]
        %v1341 = vld [vmem:[#allocation11 + $0x690] sm:$0xff]
        %v1342 = vld [vmem:[#allocation11 + $0x698] sm:$0xff]
        %v1343 = vld [vmem:[#allocation11 + $0x6a0] sm:$0xff]
        %v1344 = vld [vmem:[#allocation11 + $0x6a8] sm:$0xff]
        %v1345 = vld [vmem:[#allocation11 + $0x6b0] sm:$0xff]
        %v1346 = vld [vmem:[#allocation11 + $0x6b8] sm:$0xff]
        %v1347 = vld [vmem:[#allocation11 + $0x6c0] sm:$0xff]
        %v1348 = vld [vmem:[#allocation11 + $0x6c8] sm:$0xff]
        %v1349 = vld [vmem:[#allocation11 + $0x6d0] sm:$0xff]
        %v1350 = vld [vmem:[#allocation11 + $0x6d8] sm:$0xff]
        %v1351 = vld [vmem:[#allocation11 + $0x6e0] sm:$0xff]
        %v1352 = vld [vmem:[#allocation11 + $0x6e8] sm:$0xff]
        %v1353 = vld [vmem:[#allocation11 + $0x6f0] sm:$0xff]
        %v1354 = vld [vmem:[#allocation11 + $0x6f8] sm:$0xff]
        %v1355 = vld [vmem:[#allocation11 + $0x700] sm:$0xff]
        %v1356 = vld [vmem:[#allocation11 + $0x708] sm:$0xff]
        %v1357 = vld [vmem:[#allocation11 + $0x710] sm:$0xff]
        %v1358 = vld [vmem:[#allocation11 + $0x718] sm:$0xff]
        %v1359 = vld [vmem:[#allocation11 + $0x720] sm:$0xff]
        %v1360 = vld [vmem:[#allocation11 + $0x728] sm:$0xff]
        %v1361 = vld [vmem:[#allocation11 + $0x730] sm:$0xff]
        %v1362 = vld [vmem:[#allocation11 + $0x738] sm:$0xff]
        %v1363 = vld [vmem:[#allocation11 + $0x740] sm:$0xff]
        %v1364 = vld [vmem:[#allocation11 + $0x748] sm:$0xff]
        %v1365 = vld [vmem:[#allocation11 + $0x750] sm:$0xff]
        %v1366 = vld [vmem:[#allocation11 + $0x758] sm:$0xff]
        %v1367 = vld [vmem:[#allocation11 + $0x760] sm:$0xff]
        %v1368 = vld [vmem:[#allocation11 + $0x768] sm:$0xff]
        %v1369 = vld [vmem:[#allocation11 + $0x770] sm:$0xff]
        %v1370 = vld [vmem:[#allocation11 + $0x778] sm:$0xff]
        %v1371 = vld [vmem:[#allocation11 + $0x780] sm:$0xff]
        %v1372 = vld [vmem:[#allocation11 + $0x788] sm:$0xff]
        %v1373 = vld [vmem:[#allocation11 + $0x790] sm:$0xff]
        %v1374 = vld [vmem:[#allocation11 + $0x798] sm:$0xff]
        %v1375 = vld [vmem:[#allocation11 + $0x7a0] sm:$0xff]
        %v1376 = vld [vmem:[#allocation11 + $0x7a8] sm:$0xff]
        %v1377 = vld [vmem:[#allocation11 + $0x7b0] sm:$0xff]
        %v1378 = vld [vmem:[#allocation11 + $0x7b8] sm:$0xff]
        %v1379 = vld [vmem:[#allocation11 + $0x7c0] sm:$0xff]
        %v1380 = vld [vmem:[#allocation11 + $0x7c8] sm:$0xff]
        %v1381 = vld [vmem:[#allocation11 + $0x7d0] sm:$0xff]
        %v1382 = vld [vmem:[#allocation11 + $0x7d8] sm:$0xff]
        %v1383 = vld [vmem:[#allocation11 + $0x7e0] sm:$0xff]
        %v1384 = vld [vmem:[#allocation11 + $0x7e8] sm:$0xff]
        %v1385 = vld [vmem:[#allocation11 + $0x7f0] sm:$0xff]
        %v1386 = vld [vmem:[#allocation11 + $0x7f8] sm:$0xff]
        %v1387 = vld [vmem:[%s6] sm:$0xf]
        %v1389 = vperm.slane %v1387, 0
        %v1390 = vperm.slane %v1387, 1
        %v1391 = vperm.slane %v1387, 2
        %v1392 = vperm.slane %v1387, 3
        %1397 = vmatpush.msra.mxu0 %v1191
        %1398 = vmatpush.msra.mxu0 %v1187
        %1399 = vmatpush.msra.mxu0 %v1183
        %1400 = vmatpush.msra.mxu0 %v1179
        %1401 = vmatpush.msra.mxu0 %v1175
        %1402 = vmatpush.msra.mxu0 %v1171
        %1403 = vmatpush.msra.mxu0 %v1167
        %1404 = vmatpush.msra.mxu0 %v1163
        %1405 = vmatpush.msra.mxu0 %v1159
        %1406 = vmatpush.msra.mxu0 %v1155
        %1407 = vmatpush.msra.mxu0 %v1151
        %1408 = vmatpush.msra.mxu0 %v1147
        %1409 = vmatpush.msra.mxu0 %v1143
        %1410 = vmatpush.msra.mxu0 %v1139
        %1411 = vmatpush.msra.mxu0 %v1135
        %1412 = vmatpush.msra.mxu0 %v1131
        %1413 = vmatmul.f32.gmra.mxu0 %v1127
        %v1414 = vpop.f32.mrf.mxu0
        %v1415 = vadd.f32 %v1389, %v1414
        %1416 = vdwg.mxu0
        %1417 = vmatpush.msra.mxu0 %v1255
        %1418 = vmatpush.msra.mxu0 %v1251
        %1419 = vmatpush.msra.mxu0 %v1247
        %1420 = vmatpush.msra.mxu0 %v1243
        %1421 = vmatpush.msra.mxu0 %v1239
        %1422 = vmatpush.msra.mxu0 %v1235
        %1423 = vmatpush.msra.mxu0 %v1231
        %1424 = vmatpush.msra.mxu0 %v1227
        %1425 = vmatpush.msra.mxu0 %v1223
        %1426 = vmatpush.msra.mxu0 %v1219
        %1427 = vmatpush.msra.mxu0 %v1215
        %1428 = vmatpush.msra.mxu0 %v1211
        %1429 = vmatpush.msra.mxu0 %v1207
        %1430 = vmatpush.msra.mxu0 %v1203
        %1431 = vmatpush.msra.mxu0 %v1199
        %1432 = vmatpush.msra.mxu0 %v1195
        %1433 = vmatmul.f32.gmra.mxu0 %v1128
        %v1434 = vpop.f32.mrf.mxu0
        %v1435 = vadd.f32 %v1415, %v1434
        %1436 = vdwg.mxu0
        %1437 = vmatpush.msra.mxu0 %v1319
        %1438 = vmatpush.msra.mxu0 %v1315
        %1439 = vmatpush.msra.mxu0 %v1311
        %1440 = vmatpush.msra.mxu0 %v1307
        %1441 = vmatpush.msra.mxu0 %v1303
        %1442 = vmatpush.msra.mxu0 %v1299
        %1443 = vmatpush.msra.mxu0 %v1295
        %1444 = vmatpush.msra.mxu0 %v1291
        %1445 = vmatpush.msra.mxu0 %v1287
        %1446 = vmatpush.msra.mxu0 %v1283
        %1447 = vmatpush.msra.mxu0 %v1279
        %1448 = vmatpush.msra.mxu0 %v1275
        %1449 = vmatpush.msra.mxu0 %v1271
        %1450 = vmatpush.msra.mxu0 %v1267
        %1451 = vmatpush.msra.mxu0 %v1263
        %1452 = vmatpush.msra.mxu0 %v1259
        %1453 = vmatmul.f32.gmra.mxu0 %v1129
        %v1454 = vpop.f32.mrf.mxu0
        %v1455 = vadd.f32 %v1435, %v1454
        %1456 = vdwg.mxu0
        %1457 = vmatpush.msra.mxu0 %v1383
        %1458 = vmatpush.msra.mxu0 %v1379
        %1459 = vmatpush.msra.mxu0 %v1375
        %1460 = vmatpush.msra.mxu0 %v1371
        %1461 = vmatpush.msra.mxu0 %v1367
        %1462 = vmatpush.msra.mxu0 %v1363
        %1463 = vmatpush.msra.mxu0 %v1359
        %1464 = vmatpush.msra.mxu0 %v1355
        %1465 = vmatpush.msra.mxu0 %v1351
        %1466 = vmatpush.msra.mxu0 %v1347
        %1467 = vmatpush.msra.mxu0 %v1343
        %1468 = vmatpush.msra.mxu0 %v1339
        %1469 = vmatpush.msra.mxu0 %v1335
        %1470 = vmatpush.msra.mxu0 %v1331
        %1471 = vmatpush.msra.mxu0 %v1327
        %1472 = vmatpush.msra.mxu0 %v1323
        %1473 = vmatmul.f32.gmra.mxu0 %v1130
        %v1474 = vpop.f32.mrf.mxu0
        %v1475 = vadd.f32 %v1455, %v1474
        %1476 = vdwg.mxu0
        %1477 = vmatpush.msra.mxu0 %v1192
        %1478 = vmatpush.msra.mxu0 %v1188
        %1479 = vmatpush.msra.mxu0 %v1184
        %1480 = vmatpush.msra.mxu0 %v1180
        %1481 = vmatpush.msra.mxu0 %v1176
        %1482 = vmatpush.msra.mxu0 %v1172
        %1483 = vmatpush.msra.mxu0 %v1168
        %1484 = vmatpush.msra.mxu0 %v1164
        %1485 = vmatpush.msra.mxu0 %v1160
        %1486 = vmatpush.msra.mxu0 %v1156
        %1487 = vmatpush.msra.mxu0 %v1152
        %1488 = vmatpush.msra.mxu0 %v1148
        %1489 = vmatpush.msra.mxu0 %v1144
        %1490 = vmatpush.msra.mxu0 %v1140
        %1491 = vmatpush.msra.mxu0 %v1136
        %1492 = vmatpush.msra.mxu0 %v1132
        %1493 = vmatmul.f32.gmra.mxu0 %v1127
        %v1494 = vpop.f32.mrf.mxu0
        %v1495 = vadd.f32 %v1390, %v1494
        %1496 = vdwg.mxu0
        %1497 = vmatpush.msra.mxu0 %v1256
        %1498 = vmatpush.msra.mxu0 %v1252
        %1499 = vmatpush.msra.mxu0 %v1248
        %1500 = vmatpush.msra.mxu0 %v1244
        %1501 = vmatpush.msra.mxu0 %v1240
        %1502 = vmatpush.msra.mxu0 %v1236
        %1503 = vmatpush.msra.mxu0 %v1232
        %1504 = vmatpush.msra.mxu0 %v1228
        %1505 = vmatpush.msra.mxu0 %v1224
        %1506 = vmatpush.msra.mxu0 %v1220
        %1507 = vmatpush.msra.mxu0 %v1216
        %1508 = vmatpush.msra.mxu0 %v1212
        %1509 = vmatpush.msra.mxu0 %v1208
        %1510 = vmatpush.msra.mxu0 %v1204
        %1511 = vmatpush.msra.mxu0 %v1200
        %1512 = vmatpush.msra.mxu0 %v1196
        %1513 = vmatmul.f32.gmra.mxu0 %v1128
        %v1514 = vpop.f32.mrf.mxu0
        %v1515 = vadd.f32 %v1495, %v1514
        %1516 = vdwg.mxu0
        %1517 = vmatpush.msra.mxu0 %v1320
        %1518 = vmatpush.msra.mxu0 %v1316
        %1519 = vmatpush.msra.mxu0 %v1312
        %1520 = vmatpush.msra.mxu0 %v1308
        %1521 = vmatpush.msra.mxu0 %v1304
        %1522 = vmatpush.msra.mxu0 %v1300
        %1523 = vmatpush.msra.mxu0 %v1296
        %1524 = vmatpush.msra.mxu0 %v1292
        %1525 = vmatpush.msra.mxu0 %v1288
        %1526 = vmatpush.msra.mxu0 %v1284
        %1527 = vmatpush.msra.mxu0 %v1280
        %1528 = vmatpush.msra.mxu0 %v1276
        %1529 = vmatpush.msra.mxu0 %v1272
        %1530 = vmatpush.msra.mxu0 %v1268
        %1531 = vmatpush.msra.mxu0 %v1264
        %1532 = vmatpush.msra.mxu0 %v1260
        %1533 = vmatmul.f32.gmra.mxu0 %v1129
        %v1534 = vpop.f32.mrf.mxu0
        %v1535 = vadd.f32 %v1515, %v1534
        %1536 = vdwg.mxu0
        %1537 = vmatpush.msra.mxu0 %v1384
        %1538 = vmatpush.msra.mxu0 %v1380
        %1539 = vmatpush.msra.mxu0 %v1376
        %1540 = vmatpush.msra.mxu0 %v1372
        %1541 = vmatpush.msra.mxu0 %v1368
        %1542 = vmatpush.msra.mxu0 %v1364
        %1543 = vmatpush.msra.mxu0 %v1360
        %1544 = vmatpush.msra.mxu0 %v1356
        %1545 = vmatpush.msra.mxu0 %v1352
        %1546 = vmatpush.msra.mxu0 %v1348
        %1547 = vmatpush.msra.mxu0 %v1344
        %1548 = vmatpush.msra.mxu0 %v1340
        %1549 = vmatpush.msra.mxu0 %v1336
        %1550 = vmatpush.msra.mxu0 %v1332
        %1551 = vmatpush.msra.mxu0 %v1328
        %1552 = vmatpush.msra.mxu0 %v1324
        %1553 = vmatmul.f32.gmra.mxu0 %v1130
        %v1554 = vpop.f32.mrf.mxu0
        %v1555 = vadd.f32 %v1535, %v1554
        %1556 = vdwg.mxu0
        %1557 = vmatpush.msra.mxu0 %v1193
        %1558 = vmatpush.msra.mxu0 %v1189
        %1559 = vmatpush.msra.mxu0 %v1185
        %1560 = vmatpush.msra.mxu0 %v1181
        %1561 = vmatpush.msra.mxu0 %v1177
        %1562 = vmatpush.msra.mxu0 %v1173
        %1563 = vmatpush.msra.mxu0 %v1169
        %1564 = vmatpush.msra.mxu0 %v1165
        %1565 = vmatpush.msra.mxu0 %v1161
        %1566 = vmatpush.msra.mxu0 %v1157
        %1567 = vmatpush.msra.mxu0 %v1153
        %1568 = vmatpush.msra.mxu0 %v1149
        %1569 = vmatpush.msra.mxu0 %v1145
        %1570 = vmatpush.msra.mxu0 %v1141
        %1571 = vmatpush.msra.mxu0 %v1137
        %1572 = vmatpush.msra.mxu0 %v1133
        %1573 = vmatmul.f32.gmra.mxu0 %v1127
        %v1574 = vpop.f32.mrf.mxu0
        %v1575 = vadd.f32 %v1391, %v1574
        %1576 = vdwg.mxu0
        %1577 = vmatpush.msra.mxu0 %v1257
        %1578 = vmatpush.msra.mxu0 %v1253
        %1579 = vmatpush.msra.mxu0 %v1249
        %1580 = vmatpush.msra.mxu0 %v1245
        %1581 = vmatpush.msra.mxu0 %v1241
        %1582 = vmatpush.msra.mxu0 %v1237
        %1583 = vmatpush.msra.mxu0 %v1233
        %1584 = vmatpush.msra.mxu0 %v1229
        %1585 = vmatpush.msra.mxu0 %v1225
        %1586 = vmatpush.msra.mxu0 %v1221
        %1587 = vmatpush.msra.mxu0 %v1217
        %1588 = vmatpush.msra.mxu0 %v1213
        %1589 = vmatpush.msra.mxu0 %v1209
        %1590 = vmatpush.msra.mxu0 %v1205
        %1591 = vmatpush.msra.mxu0 %v1201
        %1592 = vmatpush.msra.mxu0 %v1197
        %1593 = vmatmul.f32.gmra.mxu0 %v1128
        %v1594 = vpop.f32.mrf.mxu0
        %v1595 = vadd.f32 %v1575, %v1594
        %1596 = vdwg.mxu0
        %1597 = vmatpush.msra.mxu0 %v1321
        %1598 = vmatpush.msra.mxu0 %v1317
        %1599 = vmatpush.msra.mxu0 %v1313
        %1600 = vmatpush.msra.mxu0 %v1309
        %1601 = vmatpush.msra.mxu0 %v1305
        %1602 = vmatpush.msra.mxu0 %v1301
        %1603 = vmatpush.msra.mxu0 %v1297
        %1604 = vmatpush.msra.mxu0 %v1293
        %1605 = vmatpush.msra.mxu0 %v1289
        %1606 = vmatpush.msra.mxu0 %v1285
        %1607 = vmatpush.msra.mxu0 %v1281
        %1608 = vmatpush.msra.mxu0 %v1277
        %1609 = vmatpush.msra.mxu0 %v1273
        %1610 = vmatpush.msra.mxu0 %v1269
        %1611 = vmatpush.msra.mxu0 %v1265
        %1612 = vmatpush.msra.mxu0 %v1261
        %1613 = vmatmul.f32.gmra.mxu0 %v1129
        %v1614 = vpop.f32.mrf.mxu0
        %v1615 = vadd.f32 %v1595, %v1614
        %1616 = vdwg.mxu0
        %1617 = vmatpush.msra.mxu0 %v1385
        %1618 = vmatpush.msra.mxu0 %v1381
        %1619 = vmatpush.msra.mxu0 %v1377
        %1620 = vmatpush.msra.mxu0 %v1373
        %1621 = vmatpush.msra.mxu0 %v1369
        %1622 = vmatpush.msra.mxu0 %v1365
        %1623 = vmatpush.msra.mxu0 %v1361
        %1624 = vmatpush.msra.mxu0 %v1357
        %1625 = vmatpush.msra.mxu0 %v1353
        %1626 = vmatpush.msra.mxu0 %v1349
        %1627 = vmatpush.msra.mxu0 %v1345
        %1628 = vmatpush.msra.mxu0 %v1341
        %1629 = vmatpush.msra.mxu0 %v1337
        %1630 = vmatpush.msra.mxu0 %v1333
        %1631 = vmatpush.msra.mxu0 %v1329
        %1632 = vmatpush.msra.mxu0 %v1325
        %1633 = vmatmul.f32.gmra.mxu0 %v1130
        %v1634 = vpop.f32.mrf.mxu0
        %v1635 = vadd.f32 %v1615, %v1634
        %1636 = vdwg.mxu0
        %1637 = vmatpush.msra.mxu0 %v1194
        %1638 = vmatpush.msra.mxu0 %v1190
        %1639 = vmatpush.msra.mxu0 %v1186
        %1640 = vmatpush.msra.mxu0 %v1182
        %1641 = vmatpush.msra.mxu0 %v1178
        %1642 = vmatpush.msra.mxu0 %v1174
        %1643 = vmatpush.msra.mxu0 %v1170
        %1644 = vmatpush.msra.mxu0 %v1166
        %1645 = vmatpush.msra.mxu0 %v1162
        %1646 = vmatpush.msra.mxu0 %v1158
        %1647 = vmatpush.msra.mxu0 %v1154
        %1648 = vmatpush.msra.mxu0 %v1150
        %1649 = vmatpush.msra.mxu0 %v1146
        %1650 = vmatpush.msra.mxu0 %v1142
        %1651 = vmatpush.msra.mxu0 %v1138
        %1652 = vmatpush.msra.mxu0 %v1134
        %1653 = vmatmul.f32.gmra.mxu0 %v1127
        %v1654 = vpop.f32.mrf.mxu0
        %v1655 = vadd.f32 %v1392, %v1654
        %1656 = vdwg.mxu0
        %1657 = vmatpush.msra.mxu0 %v1258
        %1658 = vmatpush.msra.mxu0 %v1254
        %1659 = vmatpush.msra.mxu0 %v1250
        %1660 = vmatpush.msra.mxu0 %v1246
        %1661 = vmatpush.msra.mxu0 %v1242
        %1662 = vmatpush.msra.mxu0 %v1238
        %1663 = vmatpush.msra.mxu0 %v1234
        %1664 = vmatpush.msra.mxu0 %v1230
        %1665 = vmatpush.msra.mxu0 %v1226
        %1666 = vmatpush.msra.mxu0 %v1222
        %1667 = vmatpush.msra.mxu0 %v1218
        %1668 = vmatpush.msra.mxu0 %v1214
        %1669 = vmatpush.msra.mxu0 %v1210
        %1670 = vmatpush.msra.mxu0 %v1206
        %1671 = vmatpush.msra.mxu0 %v1202
        %1672 = vmatpush.msra.mxu0 %v1198
        %1673 = vmatmul.f32.gmra.mxu0 %v1128
        %v1674 = vpop.f32.mrf.mxu0
        %v1675 = vadd.f32 %v1655, %v1674
        %1676 = vdwg.mxu0
        %1677 = vmatpush.msra.mxu0 %v1322
        %1678 = vmatpush.msra.mxu0 %v1318
        %1679 = vmatpush.msra.mxu0 %v1314
        %1680 = vmatpush.msra.mxu0 %v1310
        %1681 = vmatpush.msra.mxu0 %v1306
        %1682 = vmatpush.msra.mxu0 %v1302
        %1683 = vmatpush.msra.mxu0 %v1298
        %1684 = vmatpush.msra.mxu0 %v1294
        %1685 = vmatpush.msra.mxu0 %v1290
        %1686 = vmatpush.msra.mxu0 %v1286
        %1687 = vmatpush.msra.mxu0 %v1282
        %1688 = vmatpush.msra.mxu0 %v1278
        %1689 = vmatpush.msra.mxu0 %v1274
        %1690 = vmatpush.msra.mxu0 %v1270
        %1691 = vmatpush.msra.mxu0 %v1266
        %1692 = vmatpush.msra.mxu0 %v1262
        %1693 = vmatmul.f32.gmra.mxu0 %v1129
        %v1694 = vpop.f32.mrf.mxu0
        %v1695 = vadd.f32 %v1675, %v1694
        %1696 = vdwg.mxu0
        %1697 = vmatpush.msra.mxu0 %v1386
        %1698 = vmatpush.msra.mxu0 %v1382
        %1699 = vmatpush.msra.mxu0 %v1378
        %1700 = vmatpush.msra.mxu0 %v1374
        %1701 = vmatpush.msra.mxu0 %v1370
        %1702 = vmatpush.msra.mxu0 %v1366
        %1703 = vmatpush.msra.mxu0 %v1362
        %1704 = vmatpush.msra.mxu0 %v1358
        %1705 = vmatpush.msra.mxu0 %v1354
        %1706 = vmatpush.msra.mxu0 %v1350
        %1707 = vmatpush.msra.mxu0 %v1346
        %1708 = vmatpush.msra.mxu0 %v1342
        %1709 = vmatpush.msra.mxu0 %v1338
        %1710 = vmatpush.msra.mxu0 %v1334
        %1711 = vmatpush.msra.mxu0 %v1330
        %1712 = vmatpush.msra.mxu0 %v1326
        %1713 = vmatmul.f32.gmra.mxu0 %v1130
        %v1714 = vpop.f32.mrf.mxu0
        %v1715 = vadd.f32 %v1695, %v1714
        %1716 = vdwg.mxu0
        %v1717 = vmax.f32 %v1475, 0.0
        %v1718 = vmax.f32 %v1555, 0.0
        %v1719 = vmax.f32 %v1635, 0.0
        %v1720 = vmax.f32 %v1715, 0.0
        %v1721 = vld [vmem:[#allocation13] sm:$0xff]
        %v1722 = vld [vmem:[#allocation13 + $0x8] sm:$0xff]
        %v1723 = vld [vmem:[#allocation13 + $0x10] sm:$0xff]
        %v1724 = vld [vmem:[#allocation13 + $0x18] sm:$0xff]
        %v1725 = vld [vmem:[#allocation13 + $0x20] sm:$0xff]
        %v1726 = vld [vmem:[#allocation13 + $0x28] sm:$0xff]
        %v1727 = vld [vmem:[#allocation13 + $0x30] sm:$0xff]
        %v1728 = vld [vmem:[#allocation13 + $0x38] sm:$0xff]
        %v1729 = vld [vmem:[#allocation13 + $0x40] sm:$0xff]
        %v1730 = vld [vmem:[#allocation13 + $0x48] sm:$0xff]
        %v1731 = vld [vmem:[#allocation13 + $0x50] sm:$0xff]
        %v1732 = vld [vmem:[#allocation13 + $0x58] sm:$0xff]
        %v1733 = vld [vmem:[#allocation13 + $0x60] sm:$0xff]
        %v1734 = vld [vmem:[#allocation13 + $0x68] sm:$0xff]
        %v1735 = vld [vmem:[#allocation13 + $0x70] sm:$0xff]
        %v1736 = vld [vmem:[#allocation13 + $0x78] sm:$0xff]
        %v1737 = vld [vmem:[#allocation13 + $0x80] sm:$0xff]
        %v1738 = vld [vmem:[#allocation13 + $0x88] sm:$0xff]
        %v1739 = vld [vmem:[#allocation13 + $0x90] sm:$0xff]
        %v1740 = vld [vmem:[#allocation13 + $0x98] sm:$0xff]
        %v1741 = vld [vmem:[#allocation13 + $0xa0] sm:$0xff]
        %v1742 = vld [vmem:[#allocation13 + $0xa8] sm:$0xff]
        %v1743 = vld [vmem:[#allocation13 + $0xb0] sm:$0xff]
        %v1744 = vld [vmem:[#allocation13 + $0xb8] sm:$0xff]
        %v1745 = vld [vmem:[#allocation13 + $0xc0] sm:$0xff]
        %v1746 = vld [vmem:[#allocation13 + $0xc8] sm:$0xff]
        %v1747 = vld [vmem:[#allocation13 + $0xd0] sm:$0xff]
        %v1748 = vld [vmem:[#allocation13 + $0xd8] sm:$0xff]
        %v1749 = vld [vmem:[#allocation13 + $0xe0] sm:$0xff]
        %v1750 = vld [vmem:[#allocation13 + $0xe8] sm:$0xff]
        %v1751 = vld [vmem:[#allocation13 + $0xf0] sm:$0xff]
        %v1752 = vld [vmem:[#allocation13 + $0xf8] sm:$0xff]
        %v1753 = vld [vmem:[#allocation13 + $0x100] sm:$0xff]
        %v1754 = vld [vmem:[#allocation13 + $0x108] sm:$0xff]
        %v1755 = vld [vmem:[#allocation13 + $0x110] sm:$0xff]
        %v1756 = vld [vmem:[#allocation13 + $0x118] sm:$0xff]
        %v1757 = vld [vmem:[#allocation13 + $0x120] sm:$0xff]
        %v1758 = vld [vmem:[#allocation13 + $0x128] sm:$0xff]
        %v1759 = vld [vmem:[#allocation13 + $0x130] sm:$0xff]
        %v1760 = vld [vmem:[#allocation13 + $0x138] sm:$0xff]
        %v1761 = vld [vmem:[#allocation13 + $0x140] sm:$0xff]
        %v1762 = vld [vmem:[#allocation13 + $0x148] sm:$0xff]
        %v1763 = vld [vmem:[#allocation13 + $0x150] sm:$0xff]
        %v1764 = vld [vmem:[#allocation13 + $0x158] sm:$0xff]
        %v1765 = vld [vmem:[#allocation13 + $0x160] sm:$0xff]
        %v1766 = vld [vmem:[#allocation13 + $0x168] sm:$0xff]
        %v1767 = vld [vmem:[#allocation13 + $0x170] sm:$0xff]
        %v1768 = vld [vmem:[#allocation13 + $0x178] sm:$0xff]
        %v1769 = vld [vmem:[#allocation13 + $0x180] sm:$0xff]
        %v1770 = vld [vmem:[#allocation13 + $0x188] sm:$0xff]
        %v1771 = vld [vmem:[#allocation13 + $0x190] sm:$0xff]
        %v1772 = vld [vmem:[#allocation13 + $0x198] sm:$0xff]
        %v1773 = vld [vmem:[#allocation13 + $0x1a0] sm:$0xff]
        %v1774 = vld [vmem:[#allocation13 + $0x1a8] sm:$0xff]
        %v1775 = vld [vmem:[#allocation13 + $0x1b0] sm:$0xff]
        %v1776 = vld [vmem:[#allocation13 + $0x1b8] sm:$0xff]
        %v1777 = vld [vmem:[#allocation13 + $0x1c0] sm:$0xff]
        %v1778 = vld [vmem:[#allocation13 + $0x1c8] sm:$0xff]
        %v1779 = vld [vmem:[#allocation13 + $0x1d0] sm:$0xff]
        %v1780 = vld [vmem:[#allocation13 + $0x1d8] sm:$0xff]
        %v1781 = vld [vmem:[#allocation13 + $0x1e0] sm:$0xff]
        %v1782 = vld [vmem:[#allocation13 + $0x1e8] sm:$0xff]
        %v1783 = vld [vmem:[#allocation13 + $0x1f0] sm:$0xff]
        %v1784 = vld [vmem:[#allocation13 + $0x1f8] sm:$0xff]
        %v1785 = vld [vmem:[%s8] sm:$0x1]
        %1786 = vmatpush.msra.mxu0 %v1736
        %1787 = vmatpush.msra.mxu0 %v1735
        %1788 = vmatpush.msra.mxu0 %v1734
        %1789 = vmatpush.msra.mxu0 %v1733
        %1790 = vmatpush.msra.mxu0 %v1732
        %1791 = vmatpush.msra.mxu0 %v1731
        %1792 = vmatpush.msra.mxu0 %v1730
        %1793 = vmatpush.msra.mxu0 %v1729
        %1794 = vmatpush.msra.mxu0 %v1728
        %1795 = vmatpush.msra.mxu0 %v1727
        %1796 = vmatpush.msra.mxu0 %v1726
        %1797 = vmatpush.msra.mxu0 %v1725
        %1798 = vmatpush.msra.mxu0 %v1724
        %1799 = vmatpush.msra.mxu0 %v1723
        %1800 = vmatpush.msra.mxu0 %v1722
        %1801 = vmatpush.msra.mxu0 %v1721
        %1802 = vmatmul.f32.gmra.mxu0 %v1717
        %v1803 = vpop.f32.mrf.mxu0
        %v1804 = vadd.f32 %v1785, %v1803
        %1805 = vdwg.mxu0
        %1806 = vmatpush.msra.mxu0 %v1752
        %1807 = vmatpush.msra.mxu0 %v1751
        %1808 = vmatpush.msra.mxu0 %v1750
        %1809 = vmatpush.msra.mxu0 %v1749
        %1810 = vmatpush.msra.mxu0 %v1748
        %1811 = vmatpush.msra.mxu0 %v1747
        %1812 = vmatpush.msra.mxu0 %v1746
        %1813 = vmatpush.msra.mxu0 %v1745
        %1814 = vmatpush.msra.mxu0 %v1744
        %1815 = vmatpush.msra.mxu0 %v1743
        %1816 = vmatpush.msra.mxu0 %v1742
        %1817 = vmatpush.msra.mxu0 %v1741
        %1818 = vmatpush.msra.mxu0 %v1740
        %1819 = vmatpush.msra.mxu0 %v1739
        %1820 = vmatpush.msra.mxu0 %v1738
        %1821 = vmatpush.msra.mxu0 %v1737
        %1822 = vmatmul.f32.gmra.mxu0 %v1718
        %v1823 = vpop.f32.mrf.mxu0
        %v1824 = vadd.f32 %v1804, %v1823
        %1825 = vdwg.mxu0
        %1826 = vmatpush.msra.mxu0 %v1768
        %1827 = vmatpush.msra.mxu0 %v1767
        %1828 = vmatpush.msra.mxu0 %v1766
        %1829 = vmatpush.msra.mxu0 %v1765
        %1830 = vmatpush.msra.mxu0 %v1764
        %1831 = vmatpush.msra.mxu0 %v1763
        %1832 = vmatpush.msra.mxu0 %v1762
        %1833 = vmatpush.msra.mxu0 %v1761
        %1834 = vmatpush.msra.mxu0 %v1760
        %1835 = vmatpush.msra.mxu0 %v1759
        %1836 = vmatpush.msra.mxu0 %v1758
        %1837 = vmatpush.msra.mxu0 %v1757
        %1838 = vmatpush.msra.mxu0 %v1756
        %1839 = vmatpush.msra.mxu0 %v1755
        %1840 = vmatpush.msra.mxu0 %v1754
        %1841 = vmatpush.msra.mxu0 %v1753
        %1842 = vmatmul.f32.gmra.mxu0 %v1719
        %v1843 = vpop.f32.mrf.mxu0
        %v1844 = vadd.f32 %v1824, %v1843
        %1845 = vdwg.mxu0
        %1846 = vmatpush.msra.mxu0 %v1784
        %1847 = vmatpush.msra.mxu0 %v1783
        %1848 = vmatpush.msra.mxu0 %v1782
        %1849 = vmatpush.msra.mxu0 %v1781
        %1850 = vmatpush.msra.mxu0 %v1780
        %1851 = vmatpush.msra.mxu0 %v1779
        %1852 = vmatpush.msra.mxu0 %v1778
        %1853 = vmatpush.msra.mxu0 %v1777
        %1854 = vmatpush.msra.mxu0 %v1776
        %1855 = vmatpush.msra.mxu0 %v1775
        %1856 = vmatpush.msra.mxu0 %v1774
        %1857 = vmatpush.msra.mxu0 %v1773
        %1858 = vmatpush.msra.mxu0 %v1772
        %1859 = vmatpush.msra.mxu0 %v1771
        %1860 = vmatpush.msra.mxu0 %v1770
        %1861 = vmatpush.msra.mxu0 %v1769
        %1862 = vmatmul.f32.gmra.mxu0 %v1720
        %v1863 = vpop.f32.mrf.mxu0
        %v1864 = vadd.f32 %v1844, %v1863
        %1865 = vdwg.mxu0
        %v1866 = vtanh.pop %v1864
        %1867 = vst [vmem:[%s437] sm:$0x1] %v1866
        %s1868 = sand.u32 %s231, 1
        %s1869 = scalar_lea.sflag [#allocation4], %s1868
        %s1870 = sand.u32 %s231, 1
        %s1871 = scalar_lea.vmem [#allocation14], %s1870
        // Predicated region
        $region85: #{tpu_custom_call.1} parent=55 // pred_check
          %p1872 = pneg %p241
        $region86: #{tpu_custom_call.1} parent=55 // pred_check_branch
          %1874 = sbr.rel (%p1872) target = $region88
        $region87: #{tpu_custom_call.1} parent=55 // pred_region
          %1876 = vsyncadd %s1869, 0
          %s1877 = scalar_lea.hbm %s9, %s29
          %s1879 = sshll.u32 %s1871, 4
          %s1880 = int_to_ptr.vmem [resolvable:$true] %s1879
          %s1881 = sshll.u32 %s1877, 4
          %s1882 = int_to_ptr.hbm [resolvable:$true] %s1881
          %1884 = dma.vmem_to_hbm [thread:$0]  %s1880, 16, %s1882, %s1869
        $region88: #{tpu_custom_call.1} parent=55 // pred_fallthru
          _
      $region56: #{tpu_custom_call.1} parent=5 // pred_fallthru
        _
      %p1885 = scmp.le.s32.totalorder 2, %s24
      // Predicated region
      $region89: #{tpu_custom_call.1} parent=5 // pred_check
        %p1886 = pneg %p1885
      $region90: #{tpu_custom_call.1} parent=5 // pred_check_branch
        %1888 = sbr.rel (%p1886) target = $region92
      $region91: #{tpu_custom_call.1} parent=5 // pred_region
        %s1889 = ssub.s32 %s24, 2
        // Predicated region
        $region93: #{tpu_custom_call.1} parent=91 // pred_check
          %p1890 = pneg %p247
        $region94: #{tpu_custom_call.1} parent=91 // pred_check_branch
          %1892 = sbr.rel (%p1890) target = $region96
        $region95: #{tpu_custom_call.1} parent=91 // pred_region
          %s1893 = sand.u32 %s232, 1
          %s1894 = scalar_lea.sflag [#allocation4], %s1893
          %s1895 = sand.u32 %s232, 1
          %s1896 = scalar_lea.vmem [#allocation14], %s1895
          %1898 = dma.done %s1894, 16
        $region96: #{tpu_custom_call.1} parent=91 // pred_fallthru
          _
      $region92: #{tpu_custom_call.1} parent=5 // pred_fallthru
        _
    $region6: #{tpu_custom_call.1} parent=1 // loop_footer
      %s28 = sadd.s32 1, %s24
    $region7: #{tpu_custom_call.1} parent=1 // loop_footer_branch
      %23 = sbr.rel target = $region3
    $region8: #{tpu_custom_call.1} parent=1 // loop_exit
      _
    %1899 = vsyncpa [#allocation3], 1
    %s1900 = scalar_lea.sflag [#allocation3], 1
    %1901 = vsyncpa %s1900, 1
    %1902 = vsyncpa [#allocation6], 1
    %1903 = vsyncpa [#allocation9], 1
    %1904 = vsyncpa [#allocation12], 1
    %1905 = vsyncpa [#allocation4], 1
    %s1906 = scalar_lea.sflag [#allocation4], 1
    %1907 = vsyncpa %s1906, 1

</llo_original>
